<compile_context>
chip_gen: v7x
topology: tpu7x:2x2x1
jax: 0.10.0
libtpu: 0.0.40
codegen_flags: <defaults>
</compile_context>

<pallas_src>
import numpy as np
import jax
import jax.numpy as jnp
from jax.experimental import pallas as pl
from jax.experimental.pallas import tpu as pltpu

# ---------------- problem sizes (small, consistent with the module) ----------
B = 8                      # batch size
D_IN = 32                  # num_covariates
H = 256                    # n_features (FCNN encoder width)
C = 8                      # num_concepts
S = C * (C + 1) // 2       # number of packed lower-triangular entries
M = 4                      # num_monte_carlo
P = 5                      # pred_dim (num_classes > 2)

CONCEPT_LEARNING = "soft"
assert CONCEPT_LEARNING == "soft"  # bernoulli validation samples are unused only then

_VMEM = pl.BlockSpec(memory_space=pltpu.MemorySpace.VMEM)


# ---------------- single fused kernel -----------------------------------------
def _scbm_kernel(x_ref, eps_ref,
                 w1_ref, b1_ref, w2_ref, b2_ref,
                 wms_ref, bms_ref, wh_ref, bh_ref,
                 scat_ref, dmask_ref, gat_ref, rmat_ref, rep_ref, avg_ref,
                 prob_ref, tril_ref, y_ref):
    f32 = jnp.float32

    # ---- encoder MLP (bf16 weights on the MXU, f32 accumulate + f32 elementwise)
    x = x_ref[...]                                                       # (B, D_IN)
    h = jnp.dot(x.astype(jnp.bfloat16), w1_ref[...],
                preferred_element_type=f32) + b1_ref[...]
    h = jnp.maximum(h, 0.0)                                              # (B, H)
    h = jnp.dot(h.astype(jnp.bfloat16), w2_ref[...],
                preferred_element_type=f32) + b2_ref[...]
    h = jnp.maximum(h, 0.0)                                              # (B, H)

    # ---- fused mu / sigma heads: one (B,H)@(H,C+S) push, then lane slices
    ms = jnp.dot(h, wms_ref[...], preferred_element_type=f32) + bms_ref[...]
    c_mu = ms[:, :C]                                                     # (B, C)
    c_sigma = ms[:, C:]                                                  # (B, S)

    # ---- Cholesky factor in packed form: softplus(+1e-6) on diagonal entries
    sp = jnp.log(1.0 + jnp.exp(-jnp.abs(c_sigma))) + jnp.maximum(c_sigma, 0.0)
    dmask = dmask_ref[...]                                               # (1, S)
    sig_mod = dmask * (sp + 1e-6) + (1.0 - dmask) * c_sigma              # (B, S)

    # dense lower-triangular factor, flattened (B, C*C), via static scatter matmul
    tril_ref[...] = jnp.dot(sig_mod, scat_ref[...], preferred_element_type=f32)

    # ---- reparameterized sampling, flattened over (batch, MC sample) rows
    # noise[i, r] = sum_c L[b(i), r, c] * eps[i, c],  i = b*M + m
    eps = eps_ref[...]                                                   # (B*M, C)
    mu_rep = jnp.dot(rep_ref[...], c_mu, preferred_element_type=f32)     # (B*M, C)
    sig_rep = jnp.dot(rep_ref[...], sig_mod, preferred_element_type=f32)  # (B*M, S)
    eps_g = jnp.dot(eps, gat_ref[...], preferred_element_type=f32)       # (B*M, S)
    noise = jnp.dot(sig_rep * eps_g, rmat_ref[...],
                    preferred_element_type=f32)                          # (B*M, C)
    logits = mu_rep + noise                                              # (B*M, C)
    prob_ref[...] = 1.0 / (1.0 + jnp.exp(-logits))                       # c_mcmc_prob

    # TODO(synk): validation-path torch.bernoulli(c_mcmc_prob) is skipped — its result
    # is unused because concept_learning == 'soft' feeds the MC logits to the head.

    # ---- linear head over all MC samples in one push, softmax, MC average, log
    y_logits = jnp.dot(logits, wh_ref[...], preferred_element_type=f32) + bh_ref[...]
    y_logits = y_logits - jnp.max(y_logits, axis=1, keepdims=True)
    e = jnp.exp(y_logits)
    y_probs = e / jnp.sum(e, axis=1, keepdims=True)                      # (B*M, P)
    y_mean = jnp.dot(avg_ref[...], y_probs, preferred_element_type=f32)  # (B, P)
    y_ref[...] = jnp.log(y_mean + 1e-6)                                  # y_pred_logits


def _scbm_call(x, eps_flat, p):
    return pl.pallas_call(
        _scbm_kernel,
        out_shape=(jax.ShapeDtypeStruct((B * M, C), jnp.float32),   # sigmoid(logits), flat
                   jax.ShapeDtypeStruct((B, C * C), jnp.float32),   # scale_tril, flat
                   jax.ShapeDtypeStruct((B, P), jnp.float32)),      # y_pred_logits
        in_specs=[_VMEM] * 16,
        out_specs=(_VMEM, _VMEM, _VMEM),
    )(x, eps_flat,
      p["w1"], p["b1"], p["w2"], p["b2"],
      p["wms"], p["bms"], p["wh"], p["bh"],
      p["scatter"], p["diag_mask"], p["gather"], p["rowmat"], p["rep"], p["avg"])


# ---------------- full SCBM forward (wrapper only reshapes tiny outputs) ------
@jax.jit
def scbm_forward(x, eps_flat, params):
    prob_flat, tril_flat, y_pred_logits = _scbm_call(x, eps_flat, params)
    c_mcmc_prob = jnp.transpose(prob_flat.reshape(B, M, C), (0, 2, 1))   # (B, C, M)
    c_triang_cov = tril_flat.reshape(B, C, C)                            # (B, C, C)
    return c_mcmc_prob, c_triang_cov, y_pred_logits


# ---------------- deterministic parameter / constant init ---------------------
def init_params(key):
    ks = jax.random.split(key, 5)

    def lin(k, fan_in, shape):
        bound = 1.0 / np.sqrt(fan_in)
        return jax.random.uniform(k, shape, jnp.float32, -bound, bound)

    wmu = lin(ks[2], H, (H, C))
    wsig = lin(ks[3], H, (H, S)) * 0.01      # sigma_concepts.weight.data *= 0.01

    # static structural matrices (row-major tril packing, matching torch.tril_indices)
    rows, cols = np.tril_indices(C)
    ar = np.arange(S)
    scatter = np.zeros((S, C * C), np.float32)
    scatter[ar, rows * C + cols] = 1.0                   # packed -> dense tril (flat)
    diag_mask = (rows == cols).astype(np.float32)[None, :]
    gather = np.zeros((C, S), np.float32)
    gather[cols, ar] = 1.0                               # eps[:, col_k] gather
    rowmat = np.zeros((S, C), np.float32)
    rowmat[ar, rows] = 1.0                               # sum packed entries into rows
    rep = np.zeros((B * M, B), np.float32)
    rep[np.arange(B * M), np.arange(B * M) // M] = 1.0   # repeat batch rows M times
    avg = rep.T / float(M)                               # MC average

    return {
        "w1": lin(ks[0], D_IN, (D_IN, H)).astype(jnp.bfloat16),
        "b1": jnp.zeros((1, H), jnp.float32),
        "w2": lin(ks[1], H, (H, H)).astype(jnp.bfloat16),
        "b2": jnp.zeros((1, H), jnp.float32),
        "wms": jnp.concatenate([wmu, wsig], axis=1),     # fused mu|sigma head (H, C+S)
        "bms": jnp.zeros((1, C + S), jnp.float32),
        "wh": lin(ks[4], C, (C, P)),
        "bh": jnp.zeros((1, P), jnp.float32),
        "scatter": jnp.asarray(scatter),
        "diag_mask": jnp.asarray(diag_mask),
        "gather": jnp.asarray(gather),
        "rowmat": jnp.asarray(rowmat),
        "rep": jnp.asarray(rep),
        "avg": jnp.asarray(avg),
    }


if __name__ == "__main__":
    key = jax.random.PRNGKey(0)
    k_param, k_x, k_eps = jax.random.split(key, 3)
    params = init_params(k_param)
    x = jax.random.normal(k_x, (B, D_IN), jnp.float32)
    # standard-normal reparameterization noise; row i = (batch i // M, MC sample i % M)
    eps = jax.random.normal(k_eps, (B * M, C), jnp.float32)

    c_mcmc_prob, c_triang_cov, y_pred_logits = scbm_forward(x, eps, params)
    jax.block_until_ready((c_mcmc_prob, c_triang_cov, y_pred_logits))

    assert c_mcmc_prob.shape == (B, C, M)
    assert c_triang_cov.shape == (B, C, C)
    assert y_pred_logits.shape == (B, P)
    # Cholesky factor sanity: lower-triangular with strictly positive diagonal.
    assert bool(jnp.all(jnp.triu(c_triang_cov, k=1) == 0.0))
    assert bool(jnp.all(jnp.diagonal(c_triang_cov, axis1=1, axis2=2) > 0.0))
    print("KERNEL_OK")
</pallas_src>

<mosaic_0001>
module attributes {stable_mosaic.version = 11 : i64} {
  func.func @_scbm_kernel(%arg0: memref<8x32xf32, #tpu.memory_space<vmem>>, %arg1: memref<32x8xf32, #tpu.memory_space<vmem>>, %arg2: memref<32x256xbf16, #tpu.memory_space<vmem>>, %arg3: memref<1x256xf32, #tpu.memory_space<vmem>>, %arg4: memref<256x256xbf16, #tpu.memory_space<vmem>>, %arg5: memref<1x256xf32, #tpu.memory_space<vmem>>, %arg6: memref<256x44xf32, #tpu.memory_space<vmem>>, %arg7: memref<1x44xf32, #tpu.memory_space<vmem>>, %arg8: memref<8x5xf32, #tpu.memory_space<vmem>>, %arg9: memref<1x5xf32, #tpu.memory_space<vmem>>, %arg10: memref<36x64xf32, #tpu.memory_space<vmem>>, %arg11: memref<1x36xf32, #tpu.memory_space<vmem>>, %arg12: memref<8x36xf32, #tpu.memory_space<vmem>>, %arg13: memref<36x8xf32, #tpu.memory_space<vmem>>, %arg14: memref<32x8xf32, #tpu.memory_space<vmem>>, %arg15: memref<8x32xf32, #tpu.memory_space<vmem>>, %arg16: memref<32x8xf32, #tpu.memory_space<vmem>>, %arg17: memref<8x64xf32, #tpu.memory_space<vmem>>, %arg18: memref<8x5xf32, #tpu.memory_space<vmem>>) attributes {dimension_semantics = [], scalar_prefetch = 0 : i64, scratch_operands = 0 : i64, tpu.core_type = #tpu.core_type<tc>} {
    %c0 = arith.constant 0 : index
    %c0_0 = arith.constant 0 : index
    %0 = vector.load %arg0[%c0, %c0_0] : memref<8x32xf32, #tpu.memory_space<vmem>>, vector<8x32xf32>
    %1 = arith.truncf %0 : vector<8x32xf32> to vector<8x32xbf16>
    %c0_1 = arith.constant 0 : index
    %c0_2 = arith.constant 0 : index
    %2 = vector.load %arg2[%c0_1, %c0_2] : memref<32x256xbf16, #tpu.memory_space<vmem>>, vector<32x256xbf16>
    %cst = arith.constant dense<0.000000e+00> : vector<8x256xf32>
    %3 = tpu.matmul %1, %2, %cst {dimension_numbers = #tpu.dot_dimension_numbers<[1], [0], [0], [1], [0, 0, 1, 1], [], []>} : vector<8x32xbf16>, vector<32x256xbf16>, vector<8x256xf32> -> vector<8x256xf32>
    %c0_3 = arith.constant 0 : index
    %c0_4 = arith.constant 0 : index
    %4 = vector.load %arg3[%c0_3, %c0_4] : memref<1x256xf32, #tpu.memory_space<vmem>>, vector<1x256xf32>
    %5 = vector.broadcast %4 : vector<1x256xf32> to vector<8x256xf32>
    %6 = arith.addf %3, %5 : vector<8x256xf32>
    %cst_5 = arith.constant 0.000000e+00 : f32
    %7 = vector.broadcast %cst_5 : f32 to vector<8x256xf32>
    %8 = arith.maximumf %6, %7 : vector<8x256xf32>
    %9 = arith.truncf %8 : vector<8x256xf32> to vector<8x256xbf16>
    %c0_6 = arith.constant 0 : index
    %c0_7 = arith.constant 0 : index
    %10 = vector.load %arg4[%c0_6, %c0_7] : memref<256x256xbf16, #tpu.memory_space<vmem>>, vector<256x256xbf16>
    %cst_8 = arith.constant dense<0.000000e+00> : vector<8x256xf32>
    %11 = tpu.matmul %9, %10, %cst_8 {dimension_numbers = #tpu.dot_dimension_numbers<[1], [0], [0], [1], [0, 0, 1, 1], [], []>} : vector<8x256xbf16>, vector<256x256xbf16>, vector<8x256xf32> -> vector<8x256xf32>
    %c0_9 = arith.constant 0 : index
    %c0_10 = arith.constant 0 : index
    %12 = vector.load %arg5[%c0_9, %c0_10] : memref<1x256xf32, #tpu.memory_space<vmem>>, vector<1x256xf32>
    %13 = vector.broadcast %12 : vector<1x256xf32> to vector<8x256xf32>
    %14 = arith.addf %11, %13 : vector<8x256xf32>
    %cst_11 = arith.constant 0.000000e+00 : f32
    %15 = vector.broadcast %cst_11 : f32 to vector<8x256xf32>
    %16 = arith.maximumf %14, %15 : vector<8x256xf32>
    %c0_12 = arith.constant 0 : index
    %c0_13 = arith.constant 0 : index
    %17 = vector.load %arg6[%c0_12, %c0_13] : memref<256x44xf32, #tpu.memory_space<vmem>>, vector<256x44xf32>
    %cst_14 = arith.constant dense<0.000000e+00> : vector<8x44xf32>
    %18 = tpu.matmul %16, %17, %cst_14 {dimension_numbers = #tpu.dot_dimension_numbers<[1], [0], [0], [1], [0, 0, 1, 1], [], []>} : vector<8x256xf32>, vector<256x44xf32>, vector<8x44xf32> -> vector<8x44xf32>
    %c0_15 = arith.constant 0 : index
    %c0_16 = arith.constant 0 : index
    %19 = vector.load %arg7[%c0_15, %c0_16] : memref<1x44xf32, #tpu.memory_space<vmem>>, vector<1x44xf32>
    %20 = vector.broadcast %19 : vector<1x44xf32> to vector<8x44xf32>
    %21 = arith.addf %18, %20 : vector<8x44xf32>
    %22 = vector.extract_strided_slice %21 {offsets = [0, 0], sizes = [8, 8], strides = [1, 1]} : vector<8x44xf32> to vector<8x8xf32>
    %23 = vector.extract_strided_slice %21 {offsets = [0, 8], sizes = [8, 36], strides = [1, 1]} : vector<8x44xf32> to vector<8x36xf32>
    %24 = math.absf %23 : vector<8x36xf32>
    %cst_17 = arith.constant 0.000000e+00 : f32
    %25 = vector.broadcast %cst_17 : f32 to vector<8x36xf32>
    %26 = arith.subf %25, %24 : vector<8x36xf32>
    %27 = math.exp %26 : vector<8x36xf32>
    %cst_18 = arith.constant 1.000000e+00 : f32
    %28 = vector.broadcast %cst_18 : f32 to vector<8x36xf32>
    %29 = arith.addf %28, %27 : vector<8x36xf32>
    %30 = math.log %29 : vector<8x36xf32>
    %cst_19 = arith.constant 0.000000e+00 : f32
    %31 = vector.broadcast %cst_19 : f32 to vector<8x36xf32>
    %32 = arith.maximumf %23, %31 : vector<8x36xf32>
    %33 = arith.addf %30, %32 : vector<8x36xf32>
    %c0_20 = arith.constant 0 : index
    %c0_21 = arith.constant 0 : index
    %34 = vector.load %arg11[%c0_20, %c0_21] : memref<1x36xf32, #tpu.memory_space<vmem>>, vector<1x36xf32>
    %cst_22 = arith.constant 9.99999997E-7 : f32
    %35 = vector.broadcast %cst_22 : f32 to vector<8x36xf32>
    %36 = arith.addf %33, %35 : vector<8x36xf32>
    %37 = vector.broadcast %34 : vector<1x36xf32> to vector<8x36xf32>
    %38 = arith.mulf %37, %36 : vector<8x36xf32>
    %cst_23 = arith.constant 1.000000e+00 : f32
    %39 = vector.broadcast %cst_23 : f32 to vector<1x36xf32>
    %40 = arith.subf %39, %34 : vector<1x36xf32>
    %41 = vector.broadcast %40 : vector<1x36xf32> to vector<8x36xf32>
    %42 = arith.mulf %41, %23 : vector<8x36xf32>
    %43 = arith.addf %38, %42 : vector<8x36xf32>
    %c0_24 = arith.constant 0 : index
    %c0_25 = arith.constant 0 : index
    %44 = vector.load %arg10[%c0_24, %c0_25] : memref<36x64xf32, #tpu.memory_space<vmem>>, vector<36x64xf32>
    %cst_26 = arith.constant dense<0.000000e+00> : vector<8x64xf32>
    %45 = tpu.matmul %43, %44, %cst_26 {dimension_numbers = #tpu.dot_dimension_numbers<[1], [0], [0], [1], [0, 0, 1, 1], [], []>} : vector<8x36xf32>, vector<36x64xf32>, vector<8x64xf32> -> vector<8x64xf32>
    %c0_27 = arith.constant 0 : index
    %c0_28 = arith.constant 0 : index
    %46 = vector.load %arg17[%c0_27, %c0_28] : memref<8x64xf32, #tpu.memory_space<vmem>>, vector<8x64xf32>
    tpu.vector_store %arg17[%c0_27, %c0_28], %45 {strides = array<i32>} : memref<8x64xf32, #tpu.memory_space<vmem>>, vector<8x64xf32>,
    %c0_29 = arith.constant 0 : index
    %c0_30 = arith.constant 0 : index
    %47 = vector.load %arg1[%c0_29, %c0_30] : memref<32x8xf32, #tpu.memory_space<vmem>>, vector<32x8xf32>
    %c0_31 = arith.constant 0 : index
    %c0_32 = arith.constant 0 : index
    %48 = vector.load %arg14[%c0_31, %c0_32] : memref<32x8xf32, #tpu.memory_space<vmem>>, vector<32x8xf32>
    %cst_33 = arith.constant dense<0.000000e+00> : vector<32x8xf32>
    %49 = tpu.matmul %48, %22, %cst_33 {dimension_numbers = #tpu.dot_dimension_numbers<[1], [0], [0], [1], [0, 0, 1, 1], [], []>} : vector<32x8xf32>, vector<8x8xf32>, vector<32x8xf32> -> vector<32x8xf32>
    %c0_34 = arith.constant 0 : index
    %c0_35 = arith.constant 0 : index
    %50 = vector.load %arg14[%c0_34, %c0_35] : memref<32x8xf32, #tpu.memory_space<vmem>>, vector<32x8xf32>
    %cst_36 = arith.constant dense<0.000000e+00> : vector<32x36xf32>
    %51 = tpu.matmul %50, %43, %cst_36 {dimension_numbers = #tpu.dot_dimension_numbers<[1], [0], [0], [1], [0, 0, 1, 1], [], []>} : vector<32x8xf32>, vector<8x36xf32>, vector<32x36xf32> -> vector<32x36xf32>
    %c0_37 = arith.constant 0 : index
    %c0_38 = arith.constant 0 : index
    %52 = vector.load %arg12[%c0_37, %c0_38] : memref<8x36xf32, #tpu.memory_space<vmem>>, vector<8x36xf32>
    %cst_39 = arith.constant dense<0.000000e+00> : vector<32x36xf32>
    %53 = tpu.matmul %47, %52, %cst_39 {dimension_numbers = #tpu.dot_dimension_numbers<[1], [0], [0], [1], [0, 0, 1, 1], [], []>} : vector<32x8xf32>, vector<8x36xf32>, vector<32x36xf32> -> vector<32x36xf32>
    %54 = arith.mulf %51, %53 : vector<32x36xf32>
    %c0_40 = arith.constant 0 : index
    %c0_41 = arith.constant 0 : index
    %55 = vector.load %arg13[%c0_40, %c0_41] : memref<36x8xf32, #tpu.memory_space<vmem>>, vector<36x8xf32>
    %cst_42 = arith.constant dense<0.000000e+00> : vector<32x8xf32>
    %56 = tpu.matmul %54, %55, %cst_42 {dimension_numbers = #tpu.dot_dimension_numbers<[1], [0], [0], [1], [0, 0, 1, 1], [], []>} : vector<32x36xf32>, vector<36x8xf32>, vector<32x8xf32> -> vector<32x8xf32>
    %57 = arith.addf %49, %56 : vector<32x8xf32>
    %cst_43 = arith.constant 0.000000e+00 : f32
    %58 = vector.broadcast %cst_43 : f32 to vector<32x8xf32>
    %59 = arith.subf %58, %57 : vector<32x8xf32>
    %60 = math.exp %59 : vector<32x8xf32>
    %cst_44 = arith.constant 1.000000e+00 : f32
    %61 = vector.broadcast %cst_44 : f32 to vector<32x8xf32>
    %62 = arith.addf %61, %60 : vector<32x8xf32>
    %cst_45 = arith.constant 1.000000e+00 : f32
    %63 = vector.broadcast %cst_45 : f32 to vector<32x8xf32>
    %64 = arith.divf %63, %62 : vector<32x8xf32>
    %c0_46 = arith.constant 0 : index
    %c0_47 = arith.constant 0 : index
    %65 = vector.load %arg16[%c0_46, %c0_47] : memref<32x8xf32, #tpu.memory_space<vmem>>, vector<32x8xf32>
    tpu.vector_store %arg16[%c0_46, %c0_47], %64 {strides = array<i32>} : memref<32x8xf32, #tpu.memory_space<vmem>>, vector<32x8xf32>,
    %c0_48 = arith.constant 0 : index
    %c0_49 = arith.constant 0 : index
    %66 = vector.load %arg8[%c0_48, %c0_49] : memref<8x5xf32, #tpu.memory_space<vmem>>, vector<8x5xf32>
    %cst_50 = arith.constant dense<0.000000e+00> : vector<32x5xf32>
    %67 = tpu.matmul %57, %66, %cst_50 {dimension_numbers = #tpu.dot_dimension_numbers<[1], [0], [0], [1], [0, 0, 1, 1], [], []>} : vector<32x8xf32>, vector<8x5xf32>, vector<32x5xf32> -> vector<32x5xf32>
    %c0_51 = arith.constant 0 : index
    %c0_52 = arith.constant 0 : index
    %68 = vector.load %arg9[%c0_51, %c0_52] : memref<1x5xf32, #tpu.memory_space<vmem>>, vector<1x5xf32>
    %69 = vector.broadcast %68 : vector<1x5xf32> to vector<32x5xf32>
    %70 = arith.addf %67, %69 : vector<32x5xf32>
    %cst_53 = arith.constant dense<0xFF800000> : vector<32xf32>
    %71 = vector.multi_reduction <maximumf>, %70, %cst_53 [1] : vector<32x5xf32> to vector<32xf32>
    %72 = vector.shape_cast %71 : vector<32xf32> to vector<32x1xf32>
    %73 = vector.broadcast %72 : vector<32x1xf32> to vector<32x5xf32>
    %74 = arith.subf %70, %73 : vector<32x5xf32>
    %75 = math.exp %74 : vector<32x5xf32>
    %cst_54 = arith.constant dense<0.000000e+00> : vector<32xf32>
    %76 = vector.multi_reduction <add>, %75, %cst_54 [1] : vector<32x5xf32> to vector<32xf32>
    %77 = vector.shape_cast %76 : vector<32xf32> to vector<32x1xf32>
    %78 = vector.broadcast %77 : vector<32x1xf32> to vector<32x5xf32>
    %79 = arith.divf %75, %78 : vector<32x5xf32>
    %c0_55 = arith.constant 0 : index
    %c0_56 = arith.constant 0 : index
    %80 = vector.load %arg15[%c0_55, %c0_56] : memref<8x32xf32, #tpu.memory_space<vmem>>, vector<8x32xf32>
    %cst_57 = arith.constant dense<0.000000e+00> : vector<8x5xf32>
    %81 = tpu.matmul %80, %79, %cst_57 {dimension_numbers = #tpu.dot_dimension_numbers<[1], [0], [0], [1], [0, 0, 1, 1], [], []>} : vector<8x32xf32>, vector<32x5xf32>, vector<8x5xf32> -> vector<8x5xf32>
    %cst_58 = arith.constant 9.99999997E-7 : f32
    %82 = vector.broadcast %cst_58 : f32 to vector<8x5xf32>
    %83 = arith.addf %81, %82 : vector<8x5xf32>
    %84 = math.log %83 : vector<8x5xf32>
    %c0_59 = arith.constant 0 : index
    %c0_60 = arith.constant 0 : index
    %85 = vector.load %arg18[%c0_59, %c0_60] : memref<8x5xf32, #tpu.memory_space<vmem>>, vector<8x5xf32>
    tpu.vector_store %arg18[%c0_59, %c0_60], %84 {strides = array<i32>} : memref<8x5xf32, #tpu.memory_space<vmem>>, vector<8x5xf32>,
    return
  }
}

</mosaic_0001>

<llo_original>
// kernel: scbm_forward.1
$region0: #{scbm_forward.1}
  #allocation0 [shape = 'u32[]', space=smem, size = 0x4, offset = 0x4, fixed_abs, tag = 'smem constant byte address 0x4 - core index']
  #allocation1 [shape = 'u32[144,128]{1,0:T(1,128)}', space=vmem, size = 0x12000, scoped, tag = 'internal scratch']
  %s0 = inlined_call_operand.vmem [shape: f32[8,32], index: 0, kind: input, shape index: {}]
  %s1 = inlined_call_operand.vmem [shape: f32[32,8], index: 1, kind: input, shape index: {}]
  %s2 = inlined_call_operand.vmem [shape: bf16[32,256], index: 2, kind: input, shape index: {}]
  %s3 = inlined_call_operand.vmem [shape: f32[1,256], index: 3, kind: input, shape index: {}]
  %s4 = inlined_call_operand.vmem [shape: bf16[256,256], index: 4, kind: input, shape index: {}]
  %s5 = inlined_call_operand.vmem [shape: f32[1,256], index: 5, kind: input, shape index: {}]
  %s6 = inlined_call_operand.vmem [shape: f32[256,44], index: 6, kind: input, shape index: {}]
  %s7 = inlined_call_operand.vmem [shape: f32[1,44], index: 7, kind: input, shape index: {}]
  %s8 = inlined_call_operand.vmem [shape: f32[8,5], index: 8, kind: input, shape index: {}]
  %s9 = inlined_call_operand.vmem [shape: f32[1,5], index: 9, kind: input, shape index: {}]
  %s10 = inlined_call_operand.vmem [shape: f32[36,64], index: 10, kind: input, shape index: {}]
  %s11 = inlined_call_operand.vmem [shape: f32[1,36], index: 11, kind: input, shape index: {}]
  %s12 = inlined_call_operand.vmem [shape: f32[8,36], index: 12, kind: input, shape index: {}]
  %s13 = inlined_call_operand.vmem [shape: f32[36,8], index: 13, kind: input, shape index: {}]
  %s14 = inlined_call_operand.vmem [shape: f32[32,8], index: 14, kind: input, shape index: {}]
  %s15 = inlined_call_operand.vmem [shape: f32[8,32], index: 15, kind: input, shape index: {}]
  %s16 = inlined_call_operand.hbm [shape: f32[32,8], index: 16, kind: output, shape index: {0}]
  %s17 = inlined_call_operand.vmem [shape: f32[8,64], index: 17, kind: output, shape index: {1}]
  %s18 = inlined_call_operand.hbm [shape: f32[8,5], index: 18, kind: output, shape index: {2}]
  %19 = xla_tuple %s16, %s17, %s18
  %s20 = sld [smem:[#allocation0]]
  $region90: #{scbm_forward.1} parent=0
    _
  %s22 = ssub.s32 1, %s20
  %s23 = scalar_select 0, %s22, %s20
  $region1: #{scbm_forward.1} parent=0
    #allocation2 [shape = 'u8[16384]{0}', space=vmem, size = 0x4000, scoped, tag = 'output window, operand 0, single buffered']
    #allocation3 [shape = 's32[1]{0}', space=sflag, size = 0x4, scoped, tag = 'scoped memory for scbm_forward.1']
    #allocation4 [shape = 'u8[4096]{0}', space=vmem, size = 0x1000, scoped, tag = 'output window, operand 2, single buffered']
    #allocation5 [shape = 's32[1]{0}', space=sflag, size = 0x4, scoped, tag = 'scoped memory for scbm_forward.1']
    %24 = vsyncpa [#allocation3], 0
    %25 = vsyncpa [#allocation5], 0
    // Predicated region
    $region2: #{scbm_forward.1} parent=1 // pred_check
      _
    $region3: #{scbm_forward.1} parent=1 // pred_check_branch
      %27 = sbr.rel (0) target = $region5
    $region4: #{scbm_forward.1} parent=1 // pred_region
      _
    $region5: #{scbm_forward.1} parent=1 // pred_fallthru
      _
    // Predicated region
    $region6: #{scbm_forward.1} parent=1 // pred_check
      _
    $region7: #{scbm_forward.1} parent=1 // pred_check_branch
      %29 = sbr.rel (0) target = $region9
    $region8: #{scbm_forward.1} parent=1 // pred_region
      _
    $region9: #{scbm_forward.1} parent=1 // pred_fallthru
      _
    // Predicated region
    $region10: #{scbm_forward.1} parent=1 // pred_check
      _
    $region11: #{scbm_forward.1} parent=1 // pred_check_branch
      %31 = sbr.rel (0) target = $region13
    $region12: #{scbm_forward.1} parent=1 // pred_region
      _
    $region13: #{scbm_forward.1} parent=1 // pred_fallthru
      _
    // Predicated region
    $region14: #{scbm_forward.1} parent=1 // pred_check
      _
    $region15: #{scbm_forward.1} parent=1 // pred_check_branch
      %33 = sbr.rel (0) target = $region17
    $region16: #{scbm_forward.1} parent=1 // pred_region
      _
    $region17: #{scbm_forward.1} parent=1 // pred_fallthru
      _
    // Predicated region
    $region18: #{scbm_forward.1} parent=1 // pred_check
      _
    $region19: #{scbm_forward.1} parent=1 // pred_check_branch
      %35 = sbr.rel (0) target = $region21
    $region20: #{scbm_forward.1} parent=1 // pred_region
      _
    $region21: #{scbm_forward.1} parent=1 // pred_fallthru
      _
    // Predicated region
    $region22: #{scbm_forward.1} parent=1 // pred_check
      _
    $region23: #{scbm_forward.1} parent=1 // pred_check_branch
      %37 = sbr.rel (0) target = $region25
    $region24: #{scbm_forward.1} parent=1 // pred_region
      _
    $region25: #{scbm_forward.1} parent=1 // pred_fallthru
      _
    // Predicated region
    $region26: #{scbm_forward.1} parent=1 // pred_check
      _
    $region27: #{scbm_forward.1} parent=1 // pred_check_branch
      %39 = sbr.rel (0) target = $region29
    $region28: #{scbm_forward.1} parent=1 // pred_region
      _
    $region29: #{scbm_forward.1} parent=1 // pred_fallthru
      _
    // Predicated region
    $region30: #{scbm_forward.1} parent=1 // pred_check
      _
    $region31: #{scbm_forward.1} parent=1 // pred_check_branch
      %41 = sbr.rel (0) target = $region33
    $region32: #{scbm_forward.1} parent=1 // pred_region
      _
    $region33: #{scbm_forward.1} parent=1 // pred_fallthru
      _
    // Predicated region
    $region34: #{scbm_forward.1} parent=1 // pred_check
      _
    $region35: #{scbm_forward.1} parent=1 // pred_check_branch
      %43 = sbr.rel (0) target = $region37
    $region36: #{scbm_forward.1} parent=1 // pred_region
      _
    $region37: #{scbm_forward.1} parent=1 // pred_fallthru
      _
    // Predicated region
    $region38: #{scbm_forward.1} parent=1 // pred_check
      _
    $region39: #{scbm_forward.1} parent=1 // pred_check_branch
      %45 = sbr.rel (0) target = $region41
    $region40: #{scbm_forward.1} parent=1 // pred_region
      _
    $region41: #{scbm_forward.1} parent=1 // pred_fallthru
      _
    // Predicated region
    $region42: #{scbm_forward.1} parent=1 // pred_check
      _
    $region43: #{scbm_forward.1} parent=1 // pred_check_branch
      %47 = sbr.rel (0) target = $region45
    $region44: #{scbm_forward.1} parent=1 // pred_region
      _
    $region45: #{scbm_forward.1} parent=1 // pred_fallthru
      _
    // Predicated region
    $region46: #{scbm_forward.1} parent=1 // pred_check
      _
    $region47: #{scbm_forward.1} parent=1 // pred_check_branch
      %49 = sbr.rel (0) target = $region49
    $region48: #{scbm_forward.1} parent=1 // pred_region
      _
    $region49: #{scbm_forward.1} parent=1 // pred_fallthru
      _
    // Predicated region
    $region50: #{scbm_forward.1} parent=1 // pred_check
      _
    $region51: #{scbm_forward.1} parent=1 // pred_check_branch
      %51 = sbr.rel (0) target = $region53
    $region52: #{scbm_forward.1} parent=1 // pred_region
      _
    $region53: #{scbm_forward.1} parent=1 // pred_fallthru
      _
    // Predicated region
    $region54: #{scbm_forward.1} parent=1 // pred_check
      _
    $region55: #{scbm_forward.1} parent=1 // pred_check_branch
      %53 = sbr.rel (0) target = $region57
    $region56: #{scbm_forward.1} parent=1 // pred_region
      _
    $region57: #{scbm_forward.1} parent=1 // pred_fallthru
      _
    // Predicated region
    $region58: #{scbm_forward.1} parent=1 // pred_check
      _
    $region59: #{scbm_forward.1} parent=1 // pred_check_branch
      %55 = sbr.rel (0) target = $region61
    $region60: #{scbm_forward.1} parent=1 // pred_region
      _
    $region61: #{scbm_forward.1} parent=1 // pred_fallthru
      _
    // Predicated region
    $region62: #{scbm_forward.1} parent=1 // pred_check
      _
    $region63: #{scbm_forward.1} parent=1 // pred_check_branch
      %57 = sbr.rel (0) target = $region65
    $region64: #{scbm_forward.1} parent=1 // pred_region
      _
    $region65: #{scbm_forward.1} parent=1 // pred_fallthru
      _
    %v59 = vld [vmem:[%s0] sm:$0xff]
    %v60 = vpack.c.bf16 %v59, %v59
    %v61 = vld [vmem:[%s2] sm:$0xff]
    %v62 = vld [vmem:[%s2 + $0x8] sm:$0xff]
    %v63 = vld [vmem:[%s2 + $0x10] sm:$0xff]
    %v64 = vld [vmem:[%s2 + $0x18] sm:$0xff]
    %v65 = vld [vmem:[%s3] sm:$0x3]
    %v67 = vlaneseq
    %v68 = vshrl.u32 %v67, 7
    %v69 = vsub.s32 0, %v68
    %v70 = vrot.slane %v65, %v69
    %v71 = vlaneseq
    %v72 = vshrl.u32 %v71, 7
    %v73 = vsub.s32 1, %v72
    %v74 = vrot.slane %v65, %v73
    %v81 = vunpack.c.l.b16 %v61
    %v82 = vunpack.c.h.b16 %v61
    %v83 = vunpack.c.l.b16 %v62
    %v84 = vunpack.c.h.b16 %v62
    %v85 = vunpack.c.l.b16 %v63
    %v86 = vunpack.c.h.b16 %v63
    %v87 = vunpack.c.l.b16 %v64
    %v88 = vunpack.c.h.b16 %v64
    %v89 = vpack.c.b16 %v83, %v81
    %v90 = vpack.c.b16 %v84, %v82
    %v91 = vpack.c.b16 %v87, %v85
    %v92 = vpack.c.b16 %v88, %v86
    %vm97 = vcmask 261120
    %v99 = vsel %vm97, %v60, 0
    %101 = vmatprep.subr.bf16.mxu0 %v90
    %102 = vmatpush1.bf16.msra.mxu0 %v89
    %103 = vmatprep.subr.bf16.mxu0 %v92
    %104 = vmatpush1.bf16.msra.mxu0 %v91
    %105 = vmatprep.subr.bf16.mxu0 0
    %106 = vmatpush1.bf16.msra.mxu0 0
    %107 = vmatprep.subr.bf16.mxu0 0
    %108 = vmatpush1.bf16.msra.mxu0 0
    %109 = vmatprep.subr.bf16.mxu0 0
    %110 = vmatpush1.bf16.msra.mxu0 0
    %111 = vmatprep.subr.bf16.mxu0 0
    %112 = vmatpush1.bf16.msra.mxu0 0
    %113 = vmatprep.subr.bf16.mxu0 0
    %114 = vmatpush1.bf16.msra.mxu0 0
    %115 = vmatprep.subr.bf16.mxu0 0
    %116 = vmatpush1.bf16.msra.mxu0 0
    %117 = vmatprep.subr.bf16.mxu0 0
    %118 = vmatpush1.bf16.msra.mxu0 0
    %119 = vmatprep.subr.bf16.mxu0 0
    %120 = vmatpush1.bf16.msra.mxu0 0
    %121 = vmatprep.subr.bf16.mxu0 0
    %122 = vmatpush1.bf16.msra.mxu0 0
    %123 = vmatprep.subr.bf16.mxu0 0
    %124 = vmatpush1.bf16.msra.mxu0 0
    %125 = vmatprep.subr.bf16.mxu0 0
    %126 = vmatpush1.bf16.msra.mxu0 0
    %127 = vmatprep.subr.bf16.mxu0 0
    %128 = vmatpush1.bf16.msra.mxu0 0
    %129 = vmatprep.subr.bf16.mxu0 0
    %130 = vmatpush1.bf16.msra.mxu0 0
    %131 = vmatprep.subr.bf16.mxu0 0
    %132 = vmatpush1.bf16.msra.mxu0 0
    %133 = vmatprep.mubr.bf16.mxu0 0
    %134 = vmatmul.mubr.bf16.gmra.mrb[0].mxu0 %v99
    %v135 = vpop.f32.mrb[0].mxu0
    %v136 = vadd.f32 %v70, %v135
    %v137 = vpop.f32.mrb[0].mxu0
    %v138 = vadd.f32 %v74, %v137
    %v139 = vpop.f32.mrb[0].mxu0
    %v140 = vpop.f32.mrb[0].mxu0
    %141 = vdwg.mxu0
    %v142 = vmax.f32 %v136, 0.0
    %v143 = vmax.f32 %v138, 0.0
    %v144 = vpack.c.bf16 %v142, %v142
    %v145 = vpack.c.bf16 %v143, %v143
    %v146 = vld [vmem:[%s4] sm:$0xff]
    %v147 = vld [vmem:[%s4 + $0x8] sm:$0xff]
    %v148 = vld [vmem:[%s4 + $0x10] sm:$0xff]
    %v149 = vld [vmem:[%s4 + $0x18] sm:$0xff]
    %v150 = vld [vmem:[%s4 + $0x20] sm:$0xff]
    %v151 = vld [vmem:[%s4 + $0x28] sm:$0xff]
    %v152 = vld [vmem:[%s4 + $0x30] sm:$0xff]
    %v153 = vld [vmem:[%s4 + $0x38] sm:$0xff]
    %v154 = vld [vmem:[%s4 + $0x40] sm:$0xff]
    %v155 = vld [vmem:[%s4 + $0x48] sm:$0xff]
    %v156 = vld [vmem:[%s4 + $0x50] sm:$0xff]
    %v157 = vld [vmem:[%s4 + $0x58] sm:$0xff]
    %v158 = vld [vmem:[%s4 + $0x60] sm:$0xff]
    %v159 = vld [vmem:[%s4 + $0x68] sm:$0xff]
    %v160 = vld [vmem:[%s4 + $0x70] sm:$0xff]
    %v161 = vld [vmem:[%s4 + $0x78] sm:$0xff]
    %v162 = vld [vmem:[%s4 + $0x80] sm:$0xff]
    %v163 = vld [vmem:[%s4 + $0x88] sm:$0xff]
    %v164 = vld [vmem:[%s4 + $0x90] sm:$0xff]
    %v165 = vld [vmem:[%s4 + $0x98] sm:$0xff]
    %v166 = vld [vmem:[%s4 + $0xa0] sm:$0xff]
    %v167 = vld [vmem:[%s4 + $0xa8] sm:$0xff]
    %v168 = vld [vmem:[%s4 + $0xb0] sm:$0xff]
    %v169 = vld [vmem:[%s4 + $0xb8] sm:$0xff]
    %v170 = vld [vmem:[%s4 + $0xc0] sm:$0xff]
    %v171 = vld [vmem:[%s4 + $0xc8] sm:$0xff]
    %v172 = vld [vmem:[%s4 + $0xd0] sm:$0xff]
    %v173 = vld [vmem:[%s4 + $0xd8] sm:$0xff]
    %v174 = vld [vmem:[%s4 + $0xe0] sm:$0xff]
    %v175 = vld [vmem:[%s4 + $0xe8] sm:$0xff]
    %v176 = vld [vmem:[%s4 + $0xf0] sm:$0xff]
    %v177 = vld [vmem:[%s4 + $0xf8] sm:$0xff]
    %v178 = vld [vmem:[%s5] sm:$0x3]
    %v180 = vlaneseq
    %v181 = vshrl.u32 %v180, 7
    %v182 = vsub.s32 0, %v181
    %v183 = vrot.slane %v178, %v182
    %v184 = vlaneseq
    %v185 = vshrl.u32 %v184, 7
    %v186 = vsub.s32 1, %v185
    %v187 = vrot.slane %v178, %v186
    %v222 = vunpack.c.l.b16 %v146
    %v223 = vunpack.c.h.b16 %v146
    %v224 = vunpack.c.l.b16 %v147
    %v225 = vunpack.c.h.b16 %v147
    %v226 = vunpack.c.l.b16 %v148
    %v227 = vunpack.c.h.b16 %v148
    %v228 = vunpack.c.l.b16 %v149
    %v229 = vunpack.c.h.b16 %v149
    %v230 = vunpack.c.l.b16 %v150
    %v231 = vunpack.c.h.b16 %v150
    %v232 = vunpack.c.l.b16 %v151
    %v233 = vunpack.c.h.b16 %v151
    %v234 = vunpack.c.l.b16 %v152
    %v235 = vunpack.c.h.b16 %v152
    %v236 = vunpack.c.l.b16 %v153
    %v237 = vunpack.c.h.b16 %v153
    %v238 = vunpack.c.l.b16 %v154
    %v239 = vunpack.c.h.b16 %v154
    %v240 = vunpack.c.l.b16 %v155
    %v241 = vunpack.c.h.b16 %v155
    %v242 = vunpack.c.l.b16 %v156
    %v243 = vunpack.c.h.b16 %v156
    %v244 = vunpack.c.l.b16 %v157
    %v245 = vunpack.c.h.b16 %v157
    %v246 = vunpack.c.l.b16 %v158
    %v247 = vunpack.c.h.b16 %v158
    %v248 = vunpack.c.l.b16 %v159
    %v249 = vunpack.c.h.b16 %v159
    %v250 = vunpack.c.l.b16 %v160
    %v251 = vunpack.c.h.b16 %v160
    %v252 = vunpack.c.l.b16 %v161
    %v253 = vunpack.c.h.b16 %v161
    %v254 = vunpack.c.l.b16 %v162
    %v255 = vunpack.c.h.b16 %v162
    %v256 = vunpack.c.l.b16 %v163
    %v257 = vunpack.c.h.b16 %v163
    %v258 = vunpack.c.l.b16 %v164
    %v259 = vunpack.c.h.b16 %v164
    %v260 = vunpack.c.l.b16 %v165
    %v261 = vunpack.c.h.b16 %v165
    %v262 = vunpack.c.l.b16 %v166
    %v263 = vunpack.c.h.b16 %v166
    %v264 = vunpack.c.l.b16 %v167
    %v265 = vunpack.c.h.b16 %v167
    %v266 = vunpack.c.l.b16 %v168
    %v267 = vunpack.c.h.b16 %v168
    %v268 = vunpack.c.l.b16 %v169
    %v269 = vunpack.c.h.b16 %v169
    %v270 = vunpack.c.l.b16 %v170
    %v271 = vunpack.c.h.b16 %v170
    %v272 = vunpack.c.l.b16 %v171
    %v273 = vunpack.c.h.b16 %v171
    %v274 = vunpack.c.l.b16 %v172
    %v275 = vunpack.c.h.b16 %v172
    %v276 = vunpack.c.l.b16 %v173
    %v277 = vunpack.c.h.b16 %v173
    %v278 = vunpack.c.l.b16 %v174
    %v279 = vunpack.c.h.b16 %v174
    %v280 = vunpack.c.l.b16 %v175
    %v281 = vunpack.c.h.b16 %v175
    %v282 = vunpack.c.l.b16 %v176
    %v283 = vunpack.c.h.b16 %v176
    %v284 = vunpack.c.l.b16 %v177
    %v285 = vunpack.c.h.b16 %v177
    %v286 = vpack.c.b16 %v224, %v222
    %v287 = vpack.c.b16 %v225, %v223
    %v288 = vpack.c.b16 %v228, %v226
    %v289 = vpack.c.b16 %v229, %v227
    %v290 = vpack.c.b16 %v232, %v230
    %v291 = vpack.c.b16 %v233, %v231
    %v292 = vpack.c.b16 %v236, %v234
    %v293 = vpack.c.b16 %v237, %v235
    %v294 = vpack.c.b16 %v240, %v238
    %v295 = vpack.c.b16 %v241, %v239
    %v296 = vpack.c.b16 %v244, %v242
    %v297 = vpack.c.b16 %v245, %v243
    %v298 = vpack.c.b16 %v248, %v246
    %v299 = vpack.c.b16 %v249, %v247
    %v300 = vpack.c.b16 %v252, %v250
    %v301 = vpack.c.b16 %v253, %v251
    %v302 = vpack.c.b16 %v256, %v254
    %v303 = vpack.c.b16 %v257, %v255
    %v304 = vpack.c.b16 %v260, %v258
    %v305 = vpack.c.b16 %v261, %v259
    %v306 = vpack.c.b16 %v264, %v262
    %v307 = vpack.c.b16 %v265, %v263
    %v308 = vpack.c.b16 %v268, %v266
    %v309 = vpack.c.b16 %v269, %v267
    %v310 = vpack.c.b16 %v272, %v270
    %v311 = vpack.c.b16 %v273, %v271
    %v312 = vpack.c.b16 %v276, %v274
    %v313 = vpack.c.b16 %v277, %v275
    %v314 = vpack.c.b16 %v280, %v278
    %v315 = vpack.c.b16 %v281, %v279
    %v316 = vpack.c.b16 %v284, %v282
    %v317 = vpack.c.b16 %v285, %v283
    %350 = vmatprep.subr.bf16.mxu0 %v287
    %351 = vmatpush1.bf16.msra.mxu0 %v286
    %352 = vmatprep.subr.bf16.mxu0 %v289
    %353 = vmatpush1.bf16.msra.mxu0 %v288
    %354 = vmatprep.subr.bf16.mxu0 %v291
    %355 = vmatpush1.bf16.msra.mxu0 %v290
    %356 = vmatprep.subr.bf16.mxu0 %v293
    %357 = vmatpush1.bf16.msra.mxu0 %v292
    %358 = vmatprep.subr.bf16.mxu0 %v295
    %359 = vmatpush1.bf16.msra.mxu0 %v294
    %360 = vmatprep.subr.bf16.mxu0 %v297
    %361 = vmatpush1.bf16.msra.mxu0 %v296
    %362 = vmatprep.subr.bf16.mxu0 %v299
    %363 = vmatpush1.bf16.msra.mxu0 %v298
    %364 = vmatprep.subr.bf16.mxu0 %v301
    %365 = vmatpush1.bf16.msra.mxu0 %v300
    %366 = vmatprep.subr.bf16.mxu0 %v303
    %367 = vmatpush1.bf16.msra.mxu0 %v302
    %368 = vmatprep.subr.bf16.mxu0 %v305
    %369 = vmatpush1.bf16.msra.mxu0 %v304
    %370 = vmatprep.subr.bf16.mxu0 %v307
    %371 = vmatpush1.bf16.msra.mxu0 %v306
    %372 = vmatprep.subr.bf16.mxu0 %v309
    %373 = vmatpush1.bf16.msra.mxu0 %v308
    %374 = vmatprep.subr.bf16.mxu0 %v311
    %375 = vmatpush1.bf16.msra.mxu0 %v310
    %376 = vmatprep.subr.bf16.mxu0 %v313
    %377 = vmatpush1.bf16.msra.mxu0 %v312
    %378 = vmatprep.subr.bf16.mxu0 %v315
    %379 = vmatpush1.bf16.msra.mxu0 %v314
    %380 = vmatprep.subr.bf16.mxu0 %v317
    %381 = vmatpush1.bf16.msra.mxu0 %v316
    %382 = vmatprep.mubr.bf16.mxu0 %v145
    %383 = vmatmul.mubr.bf16.gmra.mrb[0].mxu0 %v144
    %v384 = vpop.f32.mrb[0].mxu0
    %v385 = vadd.f32 %v183, %v384
    %v386 = vpop.f32.mrb[0].mxu0
    %v387 = vadd.f32 %v187, %v386
    %v388 = vpop.f32.mrb[0].mxu0
    %v389 = vpop.f32.mrb[0].mxu0
    %390 = vdwg.mxu0
    %v391 = vmax.f32 %v385, 0.0
    %v392 = vmax.f32 %v387, 0.0
    %v393 = vld [vmem:[%s6] sm:$0xff]
    %v394 = vld [vmem:[%s6 + $0x8] sm:$0xff]
    %v395 = vld [vmem:[%s6 + $0x10] sm:$0xff]
    %v396 = vld [vmem:[%s6 + $0x18] sm:$0xff]
    %v397 = vld [vmem:[%s6 + $0x20] sm:$0xff]
    %v398 = vld [vmem:[%s6 + $0x28] sm:$0xff]
    %v399 = vld [vmem:[%s6 + $0x30] sm:$0xff]
    %v400 = vld [vmem:[%s6 + $0x38] sm:$0xff]
    %v401 = vld [vmem:[%s6 + $0x40] sm:$0xff]
    %v402 = vld [vmem:[%s6 + $0x48] sm:$0xff]
    %v403 = vld [vmem:[%s6 + $0x50] sm:$0xff]
    %v404 = vld [vmem:[%s6 + $0x58] sm:$0xff]
    %v405 = vld [vmem:[%s6 + $0x60] sm:$0xff]
    %v406 = vld [vmem:[%s6 + $0x68] sm:$0xff]
    %v407 = vld [vmem:[%s6 + $0x70] sm:$0xff]
    %v408 = vld [vmem:[%s6 + $0x78] sm:$0xff]
    %v409 = vld [vmem:[%s6 + $0x80] sm:$0xff]
    %v410 = vld [vmem:[%s6 + $0x88] sm:$0xff]
    %v411 = vld [vmem:[%s6 + $0x90] sm:$0xff]
    %v412 = vld [vmem:[%s6 + $0x98] sm:$0xff]
    %v413 = vld [vmem:[%s6 + $0xa0] sm:$0xff]
    %v414 = vld [vmem:[%s6 + $0xa8] sm:$0xff]
    %v415 = vld [vmem:[%s6 + $0xb0] sm:$0xff]
    %v416 = vld [vmem:[%s6 + $0xb8] sm:$0xff]
    %v417 = vld [vmem:[%s6 + $0xc0] sm:$0xff]
    %v418 = vld [vmem:[%s6 + $0xc8] sm:$0xff]
    %v419 = vld [vmem:[%s6 + $0xd0] sm:$0xff]
    %v420 = vld [vmem:[%s6 + $0xd8] sm:$0xff]
    %v421 = vld [vmem:[%s6 + $0xe0] sm:$0xff]
    %v422 = vld [vmem:[%s6 + $0xe8] sm:$0xff]
    %v423 = vld [vmem:[%s6 + $0xf0] sm:$0xff]
    %v424 = vld [vmem:[%s6 + $0xf8] sm:$0xff]
    %v425 = vld [vmem:[%s7] sm:$0x1]
    %v427 = vlaneseq
    %v428 = vshrl.u32 %v427, 7
    %v429 = vsub.s32 0, %v428
    %v430 = vrot.slane %v425, %v429
    %432 = vmatprep.subr.mxu0 0.0
    %433 = vmatpush1.msra.mxu0 %v393
    %434 = vmatprep.subr.mxu0 0.0
    %435 = vmatpush1.msra.mxu0 %v394
    %436 = vmatprep.subr.mxu0 0.0
    %437 = vmatpush1.msra.mxu0 %v395
    %438 = vmatprep.subr.mxu0 0.0
    %439 = vmatpush1.msra.mxu0 %v396
    %440 = vmatprep.subr.mxu0 0.0
    %441 = vmatpush1.msra.mxu0 %v397
    %442 = vmatprep.subr.mxu0 0.0
    %443 = vmatpush1.msra.mxu0 %v398
    %444 = vmatprep.subr.mxu0 0.0
    %445 = vmatpush1.msra.mxu0 %v399
    %446 = vmatprep.subr.mxu0 0.0
    %447 = vmatpush1.msra.mxu0 %v400
    %448 = vmatprep.subr.mxu0 0.0
    %449 = vmatpush1.msra.mxu0 %v401
    %450 = vmatprep.subr.mxu0 0.0
    %451 = vmatpush1.msra.mxu0 %v402
    %452 = vmatprep.subr.mxu0 0.0
    %453 = vmatpush1.msra.mxu0 %v403
    %454 = vmatprep.subr.mxu0 0.0
    %455 = vmatpush1.msra.mxu0 %v404
    %456 = vmatprep.subr.mxu0 0.0
    %457 = vmatpush1.msra.mxu0 %v405
    %458 = vmatprep.subr.mxu0 0.0
    %459 = vmatpush1.msra.mxu0 %v406
    %460 = vmatprep.subr.mxu0 0.0
    %461 = vmatpush1.msra.mxu0 %v407
    %462 = vmatprep.subr.mxu0 0.0
    %463 = vmatpush1.msra.mxu0 %v408
    %464 = vmatprep.subr.mxu0 0.0
    %465 = vmatpush1.msra.mxu0 %v409
    %466 = vmatprep.subr.mxu0 0.0
    %467 = vmatpush1.msra.mxu0 %v410
    %468 = vmatprep.subr.mxu0 0.0
    %469 = vmatpush1.msra.mxu0 %v411
    %470 = vmatprep.subr.mxu0 0.0
    %471 = vmatpush1.msra.mxu0 %v412
    %472 = vmatprep.subr.mxu0 0.0
    %473 = vmatpush1.msra.mxu0 %v413
    %474 = vmatprep.subr.mxu0 0.0
    %475 = vmatpush1.msra.mxu0 %v414
    %476 = vmatprep.subr.mxu0 0.0
    %477 = vmatpush1.msra.mxu0 %v415
    %478 = vmatprep.subr.mxu0 0.0
    %479 = vmatpush1.msra.mxu0 %v416
    %480 = vmatprep.subr.mxu0 0.0
    %481 = vmatpush1.msra.mxu0 %v417
    %482 = vmatprep.subr.mxu0 0.0
    %483 = vmatpush1.msra.mxu0 %v418
    %484 = vmatprep.subr.mxu0 0.0
    %485 = vmatpush1.msra.mxu0 %v419
    %486 = vmatprep.subr.mxu0 0.0
    %487 = vmatpush1.msra.mxu0 %v420
    %488 = vmatprep.subr.mxu0 0.0
    %489 = vmatpush1.msra.mxu0 %v421
    %490 = vmatprep.subr.mxu0 0.0
    %491 = vmatpush1.msra.mxu0 %v422
    %492 = vmatprep.subr.mxu0 0.0
    %493 = vmatpush1.msra.mxu0 %v423
    %494 = vmatprep.subr.mxu0 0.0
    %495 = vmatpush1.msra.mxu0 %v424
    %496 = vmatprep.mubr.f32.mxu0 %v392
    %497 = vmatmul.mubr.f32.gmra.mrb[0].mxu0 %v391
    %v498 = vpop.f32.mrb[0].mxu0
    %v499 = vadd.f32 %v430, %v498
    %v500 = vpop.f32.mrb[0].mxu0
    %501 = vdwg.mxu0
    %v502 = vand.u32 2147483647, %v499
    %v503 = vsub.f32 0.0, %v502
    %v504 = vmul.f32 %v503, 1.442695
    %v505 = vpow.pop %v504
    %v506 = vadd.f32 %v505, 1.0
    %v507 = vlog2.pop %v506
    %v508 = vmul.f32 %v507, 0.6931472
    %v509 = vmax.f32 %v499, 0.0
    %v510 = vadd.f32 %v508, %v509
    %v511 = vld [vmem:[%s11] sm:$0x1]
    %v512 = vadd.f32 %v510, 1e-06
    %v514 = vlaneseq
    %v515 = vshrl.u32 %v514, 7
    %v516 = vsub.s32 0, %v515
    %v517 = vrot.slane %v511, %v516
    %520 = vrot.lane.b32.xlu0 %v512, 120
    %v521 = vpop.permute.xlu0 %520
    %v523 = vmul.f32 %v517, %v521
    %v524 = vsub.f32 1.0, %v511
    %v526 = vlaneseq
    %v527 = vshrl.u32 %v526, 7
    %v528 = vsub.s32 0, %v527
    %v529 = vrot.slane %v524, %v528
    %532 = vrot.lane.b32.xlu0 %v499, 120
    %v533 = vpop.permute.xlu0 %532
    %v535 = vmul.f32 %v529, %v533
    %v536 = vadd.f32 %v523, %v535
    %v537 = vld [vmem:[%s10] sm:$0xff]
    %v538 = vld [vmem:[%s10 + $0x8] sm:$0xff]
    %v539 = vld [vmem:[%s10 + $0x10] sm:$0xff]
    %v540 = vld [vmem:[%s10 + $0x18] sm:$0xff]
    %v541 = vld [vmem:[%s10 + $0x20] sm:$0xf]
    %vm542 = vcmask 293888
    %v544 = vsel %vm542, %v536, 0
    %vm546 = vcmask 1043456
    %v548 = vsel %vm546, %v541, 0
    %550 = vmatprep.subr.mxu0 0.0
    %551 = vmatpush1.msra.mxu0 %v537
    %552 = vmatprep.subr.mxu0 0.0
    %553 = vmatpush1.msra.mxu0 %v538
    %554 = vmatprep.subr.mxu0 0.0
    %555 = vmatpush1.msra.mxu0 %v539
    %556 = vmatprep.subr.mxu0 0.0
    %557 = vmatpush1.msra.mxu0 %v540
    %558 = vmatprep.subr.mxu0 0.0
    %559 = vmatpush1.msra.mxu0 %v548
    %560 = vmatprep.subr.mxu0 0.0
    %561 = vmatpush1.msra.mxu0 0.0
    %562 = vmatprep.subr.mxu0 0.0
    %563 = vmatpush1.msra.mxu0 0.0
    %564 = vmatprep.subr.mxu0 0.0
    %565 = vmatpush1.msra.mxu0 0.0
    %566 = vmatprep.subr.mxu0 0.0
    %567 = vmatpush1.msra.mxu0 0.0
    %568 = vmatprep.subr.mxu0 0.0
    %569 = vmatpush1.msra.mxu0 0.0
    %570 = vmatprep.subr.mxu0 0.0
    %571 = vmatpush1.msra.mxu0 0.0
    %572 = vmatprep.subr.mxu0 0.0
    %573 = vmatpush1.msra.mxu0 0.0
    %574 = vmatprep.subr.mxu0 0.0
    %575 = vmatpush1.msra.mxu0 0.0
    %576 = vmatprep.subr.mxu0 0.0
    %577 = vmatpush1.msra.mxu0 0.0
    %578 = vmatprep.subr.mxu0 0.0
    %579 = vmatpush1.msra.mxu0 0.0
    %580 = vmatprep.subr.mxu0 0.0
    %581 = vmatpush1.msra.mxu0 0.0
    %582 = vmatprep.subr.mxu0 0.0
    %583 = vmatpush1.msra.mxu0 0.0
    %584 = vmatprep.subr.mxu0 0.0
    %585 = vmatpush1.msra.mxu0 0.0
    %586 = vmatprep.subr.mxu0 0.0
    %587 = vmatpush1.msra.mxu0 0.0
    %588 = vmatprep.subr.mxu0 0.0
    %589 = vmatpush1.msra.mxu0 0.0
    %590 = vmatprep.subr.mxu0 0.0
    %591 = vmatpush1.msra.mxu0 0.0
    %592 = vmatprep.subr.mxu0 0.0
    %593 = vmatpush1.msra.mxu0 0.0
    %594 = vmatprep.subr.mxu0 0.0
    %595 = vmatpush1.msra.mxu0 0.0
    %596 = vmatprep.subr.mxu0 0.0
    %597 = vmatpush1.msra.mxu0 0.0
    %598 = vmatprep.subr.mxu0 0.0
    %599 = vmatpush1.msra.mxu0 0.0
    %600 = vmatprep.subr.mxu0 0.0
    %601 = vmatpush1.msra.mxu0 0.0
    %602 = vmatprep.subr.mxu0 0.0
    %603 = vmatpush1.msra.mxu0 0.0
    %604 = vmatprep.subr.mxu0 0.0
    %605 = vmatpush1.msra.mxu0 0.0
    %606 = vmatprep.subr.mxu0 0.0
    %607 = vmatpush1.msra.mxu0 0.0
    %608 = vmatprep.subr.mxu0 0.0
    %609 = vmatpush1.msra.mxu0 0.0
    %610 = vmatprep.subr.mxu0 0.0
    %611 = vmatpush1.msra.mxu0 0.0
    %612 = vmatprep.subr.mxu0 0.0
    %613 = vmatpush1.msra.mxu0 0.0
    %614 = vmatprep.mubr.f32.mxu0 0.0
    %615 = vmatmul.mubr.f32.gmra.mrb[0].mxu0 %v544
    %v616 = vpop.f32.mrb[0].mxu0
    %v617 = vadd.f32 0.0, %v616
    %v618 = vpop.f32.mrb[0].mxu0
    %619 = vdwg.mxu0
    %vm620 = vcmask 523264
    %621 = vst.msk [vmem:[%s17] sm:$0xff] %vm620, %v617
    %v622 = vld [vmem:[%s1] sm:$0xff]
    %v623 = vld [vmem:[%s1 + $0x8] sm:$0xff]
    %v624 = vld [vmem:[%s1 + $0x10] sm:$0xff]
    %v625 = vld [vmem:[%s1 + $0x18] sm:$0xff]
    %v626 = vld [vmem:[%s14] sm:$0xff]
    %v627 = vld [vmem:[%s14 + $0x8] sm:$0xff]
    %v628 = vld [vmem:[%s14 + $0x10] sm:$0xff]
    %v629 = vld [vmem:[%s14 + $0x18] sm:$0xff]
    %vm630 = vcmask 64512
    %v632 = vsel %vm630, %v626, 0
    %v635 = vsel %vm630, %v627, 0
    %v638 = vsel %vm630, %v628, 0
    %v641 = vsel %vm630, %v629, 0
    %643 = vmatprep.subr.mxu0 0.0
    %644 = vmatpush1.msra.mxu0 %v536
    %645 = vmatprep.subr.mxu0 0.0
    %646 = vmatpush1.msra.mxu0 0.0
    %647 = vmatprep.subr.mxu0 0.0
    %648 = vmatpush1.msra.mxu0 0.0
    %649 = vmatprep.subr.mxu0 0.0
    %650 = vmatpush1.msra.mxu0 0.0
    %651 = vmatprep.subr.mxu0 0.0
    %652 = vmatpush1.msra.mxu0 0.0
    %653 = vmatprep.subr.mxu0 0.0
    %654 = vmatpush1.msra.mxu0 0.0
    %655 = vmatprep.subr.mxu0 0.0
    %656 = vmatpush1.msra.mxu0 0.0
    %657 = vmatprep.subr.mxu0 0.0
    %658 = vmatpush1.msra.mxu0 0.0
    %659 = vmatprep.subr.mxu0 0.0
    %660 = vmatpush1.msra.mxu0 0.0
    %661 = vmatprep.subr.mxu0 0.0
    %662 = vmatpush1.msra.mxu0 0.0
    %663 = vmatprep.subr.mxu0 0.0
    %664 = vmatpush1.msra.mxu0 0.0
    %665 = vmatprep.subr.mxu0 0.0
    %666 = vmatpush1.msra.mxu0 0.0
    %667 = vmatprep.subr.mxu0 0.0
    %668 = vmatpush1.msra.mxu0 0.0
    %669 = vmatprep.subr.mxu0 0.0
    %670 = vmatpush1.msra.mxu0 0.0
    %671 = vmatprep.subr.mxu0 0.0
    %672 = vmatpush1.msra.mxu0 0.0
    %673 = vmatprep.subr.mxu0 0.0
    %674 = vmatpush1.msra.mxu0 0.0
    %675 = vmatprep.subr.mxu0 0.0
    %676 = vmatpush1.msra.mxu0 0.0
    %677 = vmatprep.subr.mxu0 0.0
    %678 = vmatpush1.msra.mxu0 0.0
    %679 = vmatprep.subr.mxu0 0.0
    %680 = vmatpush1.msra.mxu0 0.0
    %681 = vmatprep.subr.mxu0 0.0
    %682 = vmatpush1.msra.mxu0 0.0
    %683 = vmatprep.subr.mxu0 0.0
    %684 = vmatpush1.msra.mxu0 0.0
    %685 = vmatprep.subr.mxu0 0.0
    %686 = vmatpush1.msra.mxu0 0.0
    %687 = vmatprep.subr.mxu0 0.0
    %688 = vmatpush1.msra.mxu0 0.0
    %689 = vmatprep.subr.mxu0 0.0
    %690 = vmatpush1.msra.mxu0 0.0
    %691 = vmatprep.subr.mxu0 0.0
    %692 = vmatpush1.msra.mxu0 0.0
    %693 = vmatprep.subr.mxu0 0.0
    %694 = vmatpush1.msra.mxu0 0.0
    %695 = vmatprep.subr.mxu0 0.0
    %696 = vmatpush1.msra.mxu0 0.0
    %697 = vmatprep.subr.mxu0 0.0
    %698 = vmatpush1.msra.mxu0 0.0
    %699 = vmatprep.subr.mxu0 0.0
    %700 = vmatpush1.msra.mxu0 0.0
    %701 = vmatprep.subr.mxu0 0.0
    %702 = vmatpush1.msra.mxu0 0.0
    %703 = vmatprep.subr.mxu0 0.0
    %704 = vmatpush1.msra.mxu0 0.0
    %705 = vmatprep.subr.mxu0 0.0
    %706 = vmatpush1.msra.mxu0 0.0
    %707 = vmatprep.mubr.f32.mxu0 0.0
    %708 = vmatmul.mubr.f32.gmra.mrb[0].mxu0 %v632
    %v709 = vpop.f32.mrb[0].mxu0
    %v710 = vadd.f32 0.0, %v709
    %v711 = vpop.f32.mrb[0].mxu0
    %712 = vmatprep.mubr.f32.mxu0 0.0
    %713 = vmatmul.mubr.f32.gmra.mrb[0].mxu0 %v635
    %v714 = vpop.f32.mrb[0].mxu0
    %v715 = vadd.f32 0.0, %v714
    %v716 = vpop.f32.mrb[0].mxu0
    %717 = vmatprep.mubr.f32.mxu0 0.0
    %718 = vmatmul.mubr.f32.gmra.mrb[0].mxu0 %v638
    %v719 = vpop.f32.mrb[0].mxu0
    %v720 = vadd.f32 0.0, %v719
    %v721 = vpop.f32.mrb[0].mxu0
    %722 = vmatprep.mubr.f32.mxu0 0.0
    %723 = vmatmul.mubr.f32.gmra.mrb[0].mxu0 %v641
    %v724 = vpop.f32.mrb[0].mxu0
    %v725 = vadd.f32 0.0, %v724
    %v726 = vpop.f32.mrb[0].mxu0
    %727 = vdwg.mxu0
    %v728 = vld [vmem:[%s12] sm:$0xff]
    %v730 = vsel %vm630, %v622, 0
    %v733 = vsel %vm630, %v623, 0
    %v736 = vsel %vm630, %v624, 0
    %v739 = vsel %vm630, %v625, 0
    %741 = vmatprep.subr.mxu0 0.0
    %742 = vmatpush1.msra.mxu0 %v728
    %743 = vmatprep.subr.mxu0 0.0
    %744 = vmatpush1.msra.mxu0 0.0
    %745 = vmatprep.subr.mxu0 0.0
    %746 = vmatpush1.msra.mxu0 0.0
    %747 = vmatprep.subr.mxu0 0.0
    %748 = vmatpush1.msra.mxu0 0.0
    %749 = vmatprep.subr.mxu0 0.0
    %750 = vmatpush1.msra.mxu0 0.0
    %751 = vmatprep.subr.mxu0 0.0
    %752 = vmatpush1.msra.mxu0 0.0
    %753 = vmatprep.subr.mxu0 0.0
    %754 = vmatpush1.msra.mxu0 0.0
    %755 = vmatprep.subr.mxu0 0.0
    %756 = vmatpush1.msra.mxu0 0.0
    %757 = vmatprep.subr.mxu0 0.0
    %758 = vmatpush1.msra.mxu0 0.0
    %759 = vmatprep.subr.mxu0 0.0
    %760 = vmatpush1.msra.mxu0 0.0
    %761 = vmatprep.subr.mxu0 0.0
    %762 = vmatpush1.msra.mxu0 0.0
    %763 = vmatprep.subr.mxu0 0.0
    %764 = vmatpush1.msra.mxu0 0.0
    %765 = vmatprep.subr.mxu0 0.0
    %766 = vmatpush1.msra.mxu0 0.0
    %767 = vmatprep.subr.mxu0 0.0
    %768 = vmatpush1.msra.mxu0 0.0
    %769 = vmatprep.subr.mxu0 0.0
    %770 = vmatpush1.msra.mxu0 0.0
    %771 = vmatprep.subr.mxu0 0.0
    %772 = vmatpush1.msra.mxu0 0.0
    %773 = vmatprep.subr.mxu0 0.0
    %774 = vmatpush1.msra.mxu0 0.0
    %775 = vmatprep.subr.mxu0 0.0
    %776 = vmatpush1.msra.mxu0 0.0
    %777 = vmatprep.subr.mxu0 0.0
    %778 = vmatpush1.msra.mxu0 0.0
    %779 = vmatprep.subr.mxu0 0.0
    %780 = vmatpush1.msra.mxu0 0.0
    %781 = vmatprep.subr.mxu0 0.0
    %782 = vmatpush1.msra.mxu0 0.0
    %783 = vmatprep.subr.mxu0 0.0
    %784 = vmatpush1.msra.mxu0 0.0
    %785 = vmatprep.subr.mxu0 0.0
    %786 = vmatpush1.msra.mxu0 0.0
    %787 = vmatprep.subr.mxu0 0.0
    %788 = vmatpush1.msra.mxu0 0.0
    %789 = vmatprep.subr.mxu0 0.0
    %790 = vmatpush1.msra.mxu0 0.0
    %791 = vmatprep.subr.mxu0 0.0
    %792 = vmatpush1.msra.mxu0 0.0
    %793 = vmatprep.subr.mxu0 0.0
    %794 = vmatpush1.msra.mxu0 0.0
    %795 = vmatprep.subr.mxu0 0.0
    %796 = vmatpush1.msra.mxu0 0.0
    %797 = vmatprep.subr.mxu0 0.0
    %798 = vmatpush1.msra.mxu0 0.0
    %799 = vmatprep.subr.mxu0 0.0
    %800 = vmatpush1.msra.mxu0 0.0
    %801 = vmatprep.subr.mxu0 0.0
    %802 = vmatpush1.msra.mxu0 0.0
    %803 = vmatprep.subr.mxu0 0.0
    %804 = vmatpush1.msra.mxu0 0.0
    %805 = vmatprep.mubr.f32.mxu0 0.0
    %806 = vmatmul.mubr.f32.gmra.mrb[0].mxu0 %v730
    %v807 = vpop.f32.mrb[0].mxu0
    %v808 = vadd.f32 0.0, %v807
    %v809 = vpop.f32.mrb[0].mxu0
    %810 = vmatprep.mubr.f32.mxu0 0.0
    %811 = vmatmul.mubr.f32.gmra.mrb[0].mxu0 %v733
    %v812 = vpop.f32.mrb[0].mxu0
    %v813 = vadd.f32 0.0, %v812
    %v814 = vpop.f32.mrb[0].mxu0
    %815 = vmatprep.mubr.f32.mxu0 0.0
    %816 = vmatmul.mubr.f32.gmra.mrb[0].mxu0 %v736
    %v817 = vpop.f32.mrb[0].mxu0
    %v818 = vadd.f32 0.0, %v817
    %v819 = vpop.f32.mrb[0].mxu0
    %820 = vmatprep.mubr.f32.mxu0 0.0
    %821 = vmatmul.mubr.f32.gmra.mrb[0].mxu0 %v739
    %v822 = vpop.f32.mrb[0].mxu0
    %v823 = vadd.f32 0.0, %v822
    %v824 = vpop.f32.mrb[0].mxu0
    %825 = vdwg.mxu0
    %v826 = vmul.f32 %v710, %v808
    %v827 = vmul.f32 %v715, %v813
    %v828 = vmul.f32 %v720, %v818
    %v829 = vmul.f32 %v725, %v823
    %v830 = vld [vmem:[%s13] sm:$0xff]
    %v831 = vld [vmem:[%s13 + $0x8] sm:$0xff]
    %v832 = vld [vmem:[%s13 + $0x10] sm:$0xff]
    %v833 = vld [vmem:[%s13 + $0x18] sm:$0xff]
    %v834 = vld [vmem:[%s13 + $0x20] sm:$0xf]
    %v836 = vsel %vm542, %v826, 0
    %v839 = vsel %vm542, %v827, 0
    %v842 = vsel %vm542, %v828, 0
    %v845 = vsel %vm542, %v829, 0
    %v848 = vsel %vm546, %v834, 0
    %850 = vmatprep.subr.mxu0 0.0
    %851 = vmatpush1.msra.mxu0 %v830
    %852 = vmatprep.subr.mxu0 0.0
    %853 = vmatpush1.msra.mxu0 %v831
    %854 = vmatprep.subr.mxu0 0.0
    %855 = vmatpush1.msra.mxu0 %v832
    %856 = vmatprep.subr.mxu0 0.0
    %857 = vmatpush1.msra.mxu0 %v833
    %858 = vmatprep.subr.mxu0 0.0
    %859 = vmatpush1.msra.mxu0 %v848
    %860 = vmatprep.subr.mxu0 0.0
    %861 = vmatpush1.msra.mxu0 0.0
    %862 = vmatprep.subr.mxu0 0.0
    %863 = vmatpush1.msra.mxu0 0.0
    %864 = vmatprep.subr.mxu0 0.0
    %865 = vmatpush1.msra.mxu0 0.0
    %866 = vmatprep.subr.mxu0 0.0
    %867 = vmatpush1.msra.mxu0 0.0
    %868 = vmatprep.subr.mxu0 0.0
    %869 = vmatpush1.msra.mxu0 0.0
    %870 = vmatprep.subr.mxu0 0.0
    %871 = vmatpush1.msra.mxu0 0.0
    %872 = vmatprep.subr.mxu0 0.0
    %873 = vmatpush1.msra.mxu0 0.0
    %874 = vmatprep.subr.mxu0 0.0
    %875 = vmatpush1.msra.mxu0 0.0
    %876 = vmatprep.subr.mxu0 0.0
    %877 = vmatpush1.msra.mxu0 0.0
    %878 = vmatprep.subr.mxu0 0.0
    %879 = vmatpush1.msra.mxu0 0.0
    %880 = vmatprep.subr.mxu0 0.0
    %881 = vmatpush1.msra.mxu0 0.0
    %882 = vmatprep.subr.mxu0 0.0
    %883 = vmatpush1.msra.mxu0 0.0
    %884 = vmatprep.subr.mxu0 0.0
    %885 = vmatpush1.msra.mxu0 0.0
    %886 = vmatprep.subr.mxu0 0.0
    %887 = vmatpush1.msra.mxu0 0.0
    %888 = vmatprep.subr.mxu0 0.0
    %889 = vmatpush1.msra.mxu0 0.0
    %890 = vmatprep.subr.mxu0 0.0
    %891 = vmatpush1.msra.mxu0 0.0
    %892 = vmatprep.subr.mxu0 0.0
    %893 = vmatpush1.msra.mxu0 0.0
    %894 = vmatprep.subr.mxu0 0.0
    %895 = vmatpush1.msra.mxu0 0.0
    %896 = vmatprep.subr.mxu0 0.0
    %897 = vmatpush1.msra.mxu0 0.0
    %898 = vmatprep.subr.mxu0 0.0
    %899 = vmatpush1.msra.mxu0 0.0
    %900 = vmatprep.subr.mxu0 0.0
    %901 = vmatpush1.msra.mxu0 0.0
    %902 = vmatprep.subr.mxu0 0.0
    %903 = vmatpush1.msra.mxu0 0.0
    %904 = vmatprep.subr.mxu0 0.0
    %905 = vmatpush1.msra.mxu0 0.0
    %906 = vmatprep.subr.mxu0 0.0
    %907 = vmatpush1.msra.mxu0 0.0
    %908 = vmatprep.subr.mxu0 0.0
    %909 = vmatpush1.msra.mxu0 0.0
    %910 = vmatprep.subr.mxu0 0.0
    %911 = vmatpush1.msra.mxu0 0.0
    %912 = vmatprep.subr.mxu0 0.0
    %913 = vmatpush1.msra.mxu0 0.0
    %914 = vmatprep.mubr.f32.mxu0 0.0
    %915 = vmatmul.mubr.f32.gmra.mrb[0].mxu0 %v836
    %v916 = vpop.f32.mrb[0].mxu0
    %v917 = vadd.f32 0.0, %v916
    %v918 = vpop.f32.mrb[0].mxu0
    %919 = vmatprep.mubr.f32.mxu0 0.0
    %920 = vmatmul.mubr.f32.gmra.mrb[0].mxu0 %v839
    %v921 = vpop.f32.mrb[0].mxu0
    %v922 = vadd.f32 0.0, %v921
    %v923 = vpop.f32.mrb[0].mxu0
    %924 = vmatprep.mubr.f32.mxu0 0.0
    %925 = vmatmul.mubr.f32.gmra.mrb[0].mxu0 %v842
    %v926 = vpop.f32.mrb[0].mxu0
    %v927 = vadd.f32 0.0, %v926
    %v928 = vpop.f32.mrb[0].mxu0
    %929 = vmatprep.mubr.f32.mxu0 0.0
    %930 = vmatmul.mubr.f32.gmra.mrb[0].mxu0 %v845
    %v931 = vpop.f32.mrb[0].mxu0
    %v932 = vadd.f32 0.0, %v931
    %v933 = vpop.f32.mrb[0].mxu0
    %934 = vdwg.mxu0
    %935 = vmatprep.subr.mxu0 0.0
    %936 = vmatpush1.msra.mxu0 %v499
    %937 = vmatprep.subr.mxu0 0.0
    %938 = vmatpush1.msra.mxu0 0.0
    %939 = vmatprep.subr.mxu0 0.0
    %940 = vmatpush1.msra.mxu0 0.0
    %941 = vmatprep.subr.mxu0 0.0
    %942 = vmatpush1.msra.mxu0 0.0
    %943 = vmatprep.subr.mxu0 0.0
    %944 = vmatpush1.msra.mxu0 0.0
    %945 = vmatprep.subr.mxu0 0.0
    %946 = vmatpush1.msra.mxu0 0.0
    %947 = vmatprep.subr.mxu0 0.0
    %948 = vmatpush1.msra.mxu0 0.0
    %949 = vmatprep.subr.mxu0 0.0
    %950 = vmatpush1.msra.mxu0 0.0
    %951 = vmatprep.subr.mxu0 0.0
    %952 = vmatpush1.msra.mxu0 0.0
    %953 = vmatprep.subr.mxu0 0.0
    %954 = vmatpush1.msra.mxu0 0.0
    %955 = vmatprep.subr.mxu0 0.0
    %956 = vmatpush1.msra.mxu0 0.0
    %957 = vmatprep.subr.mxu0 0.0
    %958 = vmatpush1.msra.mxu0 0.0
    %959 = vmatprep.subr.mxu0 0.0
    %960 = vmatpush1.msra.mxu0 0.0
    %961 = vmatprep.subr.mxu0 0.0
    %962 = vmatpush1.msra.mxu0 0.0
    %963 = vmatprep.subr.mxu0 0.0
    %964 = vmatpush1.msra.mxu0 0.0
    %965 = vmatprep.subr.mxu0 0.0
    %966 = vmatpush1.msra.mxu0 0.0
    %967 = vmatprep.subr.mxu0 0.0
    %968 = vmatpush1.msra.mxu0 0.0
    %969 = vmatprep.subr.mxu0 0.0
    %970 = vmatpush1.msra.mxu0 0.0
    %971 = vmatprep.subr.mxu0 0.0
    %972 = vmatpush1.msra.mxu0 0.0
    %973 = vmatprep.subr.mxu0 0.0
    %974 = vmatpush1.msra.mxu0 0.0
    %975 = vmatprep.subr.mxu0 0.0
    %976 = vmatpush1.msra.mxu0 0.0
    %977 = vmatprep.subr.mxu0 0.0
    %978 = vmatpush1.msra.mxu0 0.0
    %979 = vmatprep.subr.mxu0 0.0
    %980 = vmatpush1.msra.mxu0 0.0
    %981 = vmatprep.subr.mxu0 0.0
    %982 = vmatpush1.msra.mxu0 0.0
    %983 = vmatprep.subr.mxu0 0.0
    %984 = vmatpush1.msra.mxu0 0.0
    %985 = vmatprep.subr.mxu0 0.0
    %986 = vmatpush1.msra.mxu0 0.0
    %987 = vmatprep.subr.mxu0 0.0
    %988 = vmatpush1.msra.mxu0 0.0
    %989 = vmatprep.subr.mxu0 0.0
    %990 = vmatpush1.msra.mxu0 0.0
    %991 = vmatprep.subr.mxu0 0.0
    %992 = vmatpush1.msra.mxu0 0.0
    %993 = vmatprep.subr.mxu0 0.0
    %994 = vmatpush1.msra.mxu0 0.0
    %995 = vmatprep.subr.mxu0 0.0
    %996 = vmatpush1.msra.mxu0 0.0
    %997 = vmatprep.subr.mxu0 0.0
    %998 = vmatpush1.msra.mxu0 0.0
    %999 = vmatprep.mubr.f32.mxu0 0.0
    %1000 = vmatmul.mubr.f32.gmra.mrb[0].mxu0 %v632
    %v1001 = vpop.f32.mrb[0].mxu0
    %v1002 = vadd.f32 %v917, %v1001
    %v1003 = vpop.f32.mrb[0].mxu0
    %1004 = vmatprep.mubr.f32.mxu0 0.0
    %1005 = vmatmul.mubr.f32.gmra.mrb[0].mxu0 %v635
    %v1006 = vpop.f32.mrb[0].mxu0
    %v1007 = vadd.f32 %v922, %v1006
    %v1008 = vpop.f32.mrb[0].mxu0
    %1009 = vmatprep.mubr.f32.mxu0 0.0
    %1010 = vmatmul.mubr.f32.gmra.mrb[0].mxu0 %v638
    %v1011 = vpop.f32.mrb[0].mxu0
    %v1012 = vadd.f32 %v927, %v1011
    %v1013 = vpop.f32.mrb[0].mxu0
    %1014 = vmatprep.mubr.f32.mxu0 0.0
    %1015 = vmatmul.mubr.f32.gmra.mrb[0].mxu0 %v641
    %v1016 = vpop.f32.mrb[0].mxu0
    %v1017 = vadd.f32 %v932, %v1016
    %v1018 = vpop.f32.mrb[0].mxu0
    %1019 = vdwg.mxu0
    %v1020 = vsub.f32 0.0, %v1002
    %v1021 = vsub.f32 0.0, %v1007
    %v1022 = vsub.f32 0.0, %v1012
    %v1023 = vsub.f32 0.0, %v1017
    %v1024 = vmul.f32 %v1020, 1.442695
    %v1025 = vpow.pop %v1024
    %v1026 = vmul.f32 %v1021, 1.442695
    %v1027 = vpow.pop %v1026
    %v1028 = vmul.f32 %v1022, 1.442695
    %v1029 = vpow.pop %v1028
    %v1030 = vmul.f32 %v1023, 1.442695
    %v1031 = vpow.pop %v1030
    %v1032 = vadd.f32 %v1025, 1.0
    %v1033 = vadd.f32 %v1027, 1.0
    %v1034 = vadd.f32 %v1029, 1.0
    %v1035 = vadd.f32 %v1031, 1.0
    %v1036 = vrcp.pop %v1032
    %v1037 = vmul.f32 1.0, %v1036
    %v1038 = vrcp.pop %v1033
    %v1039 = vmul.f32 1.0, %v1038
    %v1040 = vrcp.pop %v1034
    %v1041 = vmul.f32 1.0, %v1040
    %v1042 = vrcp.pop %v1035
    %v1043 = vmul.f32 1.0, %v1042
    %1044 = vst.msk [vmem:[#allocation2] sm:$0xff] %vm630, %v1037
    %1045 = vst.msk [vmem:[#allocation2 + $0x8] sm:$0xff] %vm630, %v1039
    %1046 = vst.msk [vmem:[#allocation2 + $0x10] sm:$0xff] %vm630, %v1041
    %1047 = vst.msk [vmem:[#allocation2 + $0x18] sm:$0xff] %vm630, %v1043
    %v1048 = vld [vmem:[%s8] sm:$0xff]
    %v1049 = vld [vmem:[%s9] sm:$0x1]
    %v1051 = vlaneseq
    %v1052 = vshrl.u32 %v1051, 7
    %v1053 = vsub.s32 0, %v1052
    %v1054 = vrot.slane %v1049, %v1053
    %v1057 = vsel %vm630, %v1002, 0
    %v1060 = vsel %vm630, %v1007, 0
    %v1063 = vsel %vm630, %v1012, 0
    %v1066 = vsel %vm630, %v1017, 0
    %1068 = vmatprep.subr.mxu0 0.0
    %1069 = vmatpush1.msra.mxu0 %v1048
    %1070 = vmatprep.subr.mxu0 0.0
    %1071 = vmatpush1.msra.mxu0 0.0
    %1072 = vmatprep.subr.mxu0 0.0
    %1073 = vmatpush1.msra.mxu0 0.0
    %1074 = vmatprep.subr.mxu0 0.0
    %1075 = vmatpush1.msra.mxu0 0.0
    %1076 = vmatprep.subr.mxu0 0.0
    %1077 = vmatpush1.msra.mxu0 0.0
    %1078 = vmatprep.subr.mxu0 0.0
    %1079 = vmatpush1.msra.mxu0 0.0
    %1080 = vmatprep.subr.mxu0 0.0
    %1081 = vmatpush1.msra.mxu0 0.0
    %1082 = vmatprep.subr.mxu0 0.0
    %1083 = vmatpush1.msra.mxu0 0.0
    %1084 = vmatprep.subr.mxu0 0.0
    %1085 = vmatpush1.msra.mxu0 0.0
    %1086 = vmatprep.subr.mxu0 0.0
    %1087 = vmatpush1.msra.mxu0 0.0
    %1088 = vmatprep.subr.mxu0 0.0
    %1089 = vmatpush1.msra.mxu0 0.0
    %1090 = vmatprep.subr.mxu0 0.0
    %1091 = vmatpush1.msra.mxu0 0.0
    %1092 = vmatprep.subr.mxu0 0.0
    %1093 = vmatpush1.msra.mxu0 0.0
    %1094 = vmatprep.subr.mxu0 0.0
    %1095 = vmatpush1.msra.mxu0 0.0
    %1096 = vmatprep.subr.mxu0 0.0
    %1097 = vmatpush1.msra.mxu0 0.0
    %1098 = vmatprep.subr.mxu0 0.0
    %1099 = vmatpush1.msra.mxu0 0.0
    %1100 = vmatprep.subr.mxu0 0.0
    %1101 = vmatpush1.msra.mxu0 0.0
    %1102 = vmatprep.subr.mxu0 0.0
    %1103 = vmatpush1.msra.mxu0 0.0
    %1104 = vmatprep.subr.mxu0 0.0
    %1105 = vmatpush1.msra.mxu0 0.0
    %1106 = vmatprep.subr.mxu0 0.0
    %1107 = vmatpush1.msra.mxu0 0.0
    %1108 = vmatprep.subr.mxu0 0.0
    %1109 = vmatpush1.msra.mxu0 0.0
    %1110 = vmatprep.subr.mxu0 0.0
    %1111 = vmatpush1.msra.mxu0 0.0
    %1112 = vmatprep.subr.mxu0 0.0
    %1113 = vmatpush1.msra.mxu0 0.0
    %1114 = vmatprep.subr.mxu0 0.0
    %1115 = vmatpush1.msra.mxu0 0.0
    %1116 = vmatprep.subr.mxu0 0.0
    %1117 = vmatpush1.msra.mxu0 0.0
    %1118 = vmatprep.subr.mxu0 0.0
    %1119 = vmatpush1.msra.mxu0 0.0
    %1120 = vmatprep.subr.mxu0 0.0
    %1121 = vmatpush1.msra.mxu0 0.0
    %1122 = vmatprep.subr.mxu0 0.0
    %1123 = vmatpush1.msra.mxu0 0.0
    %1124 = vmatprep.subr.mxu0 0.0
    %1125 = vmatpush1.msra.mxu0 0.0
    %1126 = vmatprep.subr.mxu0 0.0
    %1127 = vmatpush1.msra.mxu0 0.0
    %1128 = vmatprep.subr.mxu0 0.0
    %1129 = vmatpush1.msra.mxu0 0.0
    %1130 = vmatprep.subr.mxu0 0.0
    %1131 = vmatpush1.msra.mxu0 0.0
    %1132 = vmatprep.mubr.f32.mxu0 0.0
    %1133 = vmatmul.mubr.f32.gmra.mrb[0].mxu0 %v1057
    %v1134 = vpop.f32.mrb[0].mxu0
    %v1135 = vadd.f32 %v1054, %v1134
    %v1136 = vpop.f32.mrb[0].mxu0
    %1137 = vmatprep.mubr.f32.mxu0 0.0
    %1138 = vmatmul.mubr.f32.gmra.mrb[0].mxu0 %v1060
    %v1139 = vpop.f32.mrb[0].mxu0
    %v1140 = vadd.f32 %v1054, %v1139
    %v1141 = vpop.f32.mrb[0].mxu0
    %1142 = vmatprep.mubr.f32.mxu0 0.0
    %1143 = vmatmul.mubr.f32.gmra.mrb[0].mxu0 %v1063
    %v1144 = vpop.f32.mrb[0].mxu0
    %v1145 = vadd.f32 %v1054, %v1144
    %v1146 = vpop.f32.mrb[0].mxu0
    %1147 = vmatprep.mubr.f32.mxu0 0.0
    %1148 = vmatmul.mubr.f32.gmra.mrb[0].mxu0 %v1066
    %v1149 = vpop.f32.mrb[0].mxu0
    %v1150 = vadd.f32 %v1054, %v1149
    %v1151 = vpop.f32.mrb[0].mxu0
    %1152 = vdwg.mxu0
    %vm1153 = vcmask 39936
    %v1154 = vsel %vm1153, %v1135, -inf
    %1155 = vmax.xlane.f32.xlu0 %v1154
    %v1156 = vpop.xlane.xlu0 %1155
    %v1157 = vsel %vm1153, %v1140, -inf
    %1158 = vmax.xlane.f32.xlu0 %v1157
    %v1159 = vpop.xlane.xlu0 %1158
    %v1160 = vsel %vm1153, %v1145, -inf
    %1161 = vmax.xlane.f32.xlu0 %v1160
    %v1162 = vpop.xlane.xlu0 %1161
    %v1163 = vsel %vm1153, %v1150, -inf
    %1164 = vmax.xlane.f32.xlu0 %v1163
    %v1165 = vpop.xlane.xlu0 %1164
    %v1166 = vsub.f32 %v1135, %v1156
    %v1167 = vsub.f32 %v1140, %v1159
    %v1168 = vsub.f32 %v1145, %v1162
    %v1169 = vsub.f32 %v1150, %v1165
    %v1170 = vmul.f32 %v1166, 1.442695
    %v1171 = vpow.pop %v1170
    %v1172 = vmul.f32 %v1167, 1.442695
    %v1173 = vpow.pop %v1172
    %v1174 = vmul.f32 %v1168, 1.442695
    %v1175 = vpow.pop %v1174
    %v1176 = vmul.f32 %v1169, 1.442695
    %v1177 = vpow.pop %v1176
    %v1178 = vsel %vm1153, %v1171, 0.0
    %1179 = vadd.xlane.f32.xlu0 %v1178
    %v1180 = vpop.xlane.xlu0 %1179
    %v1181 = vsel %vm1153, %v1173, 0.0
    %1182 = vadd.xlane.f32.xlu0 %v1181
    %v1183 = vpop.xlane.xlu0 %1182
    %v1184 = vsel %vm1153, %v1175, 0.0
    %1185 = vadd.xlane.f32.xlu0 %v1184
    %v1186 = vpop.xlane.xlu0 %1185
    %v1187 = vsel %vm1153, %v1177, 0.0
    %1188 = vadd.xlane.f32.xlu0 %v1187
    %v1189 = vpop.xlane.xlu0 %1188
    %v1190 = vrcp.pop %v1180
    %v1191 = vmul.f32 %v1171, %v1190
    %v1192 = vrcp.pop %v1183
    %v1193 = vmul.f32 %v1173, %v1192
    %v1194 = vrcp.pop %v1186
    %v1195 = vmul.f32 %v1175, %v1194
    %v1196 = vrcp.pop %v1189
    %v1197 = vmul.f32 %v1177, %v1196
    %v1198 = vld [vmem:[%s15] sm:$0xff]
    %v1200 = vsel %vm97, %v1198, 0
    %1202 = vmatprep.subr.mxu0 0.0
    %1203 = vmatpush1.msra.mxu0 %v1191
    %1204 = vmatprep.subr.mxu0 0.0
    %1205 = vmatpush1.msra.mxu0 %v1193
    %1206 = vmatprep.subr.mxu0 0.0
    %1207 = vmatpush1.msra.mxu0 %v1195
    %1208 = vmatprep.subr.mxu0 0.0
    %1209 = vmatpush1.msra.mxu0 %v1197
    %1210 = vmatprep.subr.mxu0 0.0
    %1211 = vmatpush1.msra.mxu0 0.0
    %1212 = vmatprep.subr.mxu0 0.0
    %1213 = vmatpush1.msra.mxu0 0.0
    %1214 = vmatprep.subr.mxu0 0.0
    %1215 = vmatpush1.msra.mxu0 0.0
    %1216 = vmatprep.subr.mxu0 0.0
    %1217 = vmatpush1.msra.mxu0 0.0
    %1218 = vmatprep.subr.mxu0 0.0
    %1219 = vmatpush1.msra.mxu0 0.0
    %1220 = vmatprep.subr.mxu0 0.0
    %1221 = vmatpush1.msra.mxu0 0.0
    %1222 = vmatprep.subr.mxu0 0.0
    %1223 = vmatpush1.msra.mxu0 0.0
    %1224 = vmatprep.subr.mxu0 0.0
    %1225 = vmatpush1.msra.mxu0 0.0
    %1226 = vmatprep.subr.mxu0 0.0
    %1227 = vmatpush1.msra.mxu0 0.0
    %1228 = vmatprep.subr.mxu0 0.0
    %1229 = vmatpush1.msra.mxu0 0.0
    %1230 = vmatprep.subr.mxu0 0.0
    %1231 = vmatpush1.msra.mxu0 0.0
    %1232 = vmatprep.subr.mxu0 0.0
    %1233 = vmatpush1.msra.mxu0 0.0
    %1234 = vmatprep.subr.mxu0 0.0
    %1235 = vmatpush1.msra.mxu0 0.0
    %1236 = vmatprep.subr.mxu0 0.0
    %1237 = vmatpush1.msra.mxu0 0.0
    %1238 = vmatprep.subr.mxu0 0.0
    %1239 = vmatpush1.msra.mxu0 0.0
    %1240 = vmatprep.subr.mxu0 0.0
    %1241 = vmatpush1.msra.mxu0 0.0
    %1242 = vmatprep.subr.mxu0 0.0
    %1243 = vmatpush1.msra.mxu0 0.0
    %1244 = vmatprep.subr.mxu0 0.0
    %1245 = vmatpush1.msra.mxu0 0.0
    %1246 = vmatprep.subr.mxu0 0.0
    %1247 = vmatpush1.msra.mxu0 0.0
    %1248 = vmatprep.subr.mxu0 0.0
    %1249 = vmatpush1.msra.mxu0 0.0
    %1250 = vmatprep.subr.mxu0 0.0
    %1251 = vmatpush1.msra.mxu0 0.0
    %1252 = vmatprep.subr.mxu0 0.0
    %1253 = vmatpush1.msra.mxu0 0.0
    %1254 = vmatprep.subr.mxu0 0.0
    %1255 = vmatpush1.msra.mxu0 0.0
    %1256 = vmatprep.subr.mxu0 0.0
    %1257 = vmatpush1.msra.mxu0 0.0
    %1258 = vmatprep.subr.mxu0 0.0
    %1259 = vmatpush1.msra.mxu0 0.0
    %1260 = vmatprep.subr.mxu0 0.0
    %1261 = vmatpush1.msra.mxu0 0.0
    %1262 = vmatprep.subr.mxu0 0.0
    %1263 = vmatpush1.msra.mxu0 0.0
    %1264 = vmatprep.subr.mxu0 0.0
    %1265 = vmatpush1.msra.mxu0 0.0
    %1266 = vmatprep.mubr.f32.mxu0 0.0
    %1267 = vmatmul.mubr.f32.gmra.mrb[0].mxu0 %v1200
    %v1268 = vpop.f32.mrb[0].mxu0
    %v1269 = vadd.f32 1e-06, %v1268
    %v1270 = vpop.f32.mrb[0].mxu0
    %1271 = vdwg.mxu0
    %v1272 = vlog2.pop %v1269
    %v1273 = vmul.f32 %v1272, 0.6931472
    %1274 = vst.msk [vmem:[#allocation4] sm:$0xff] %vm1153, %v1273
    // Predicated region
    $region66: #{scbm_forward.1} parent=1 // pred_check
      _
    $region67: #{scbm_forward.1} parent=1 // pred_check_branch
      %1276 = sbr.rel (0) target = $region69
    $region68: #{scbm_forward.1} parent=1 // pred_region
      %s1278 = ssub.s32 512, 512
      %1279 = vsyncadd [#allocation3], %s1278
      %s1280 = sshll.u32 [#allocation2], 4
      %s1281 = int_to_ptr.vmem [resolvable:$true] %s1280
      %1286 = dma.vmem_to_hbm [thread:$0]  %s1281, 512, %s16, [#allocation3], 128, 128, 8
    $region69: #{scbm_forward.1} parent=1 // pred_fallthru
      _
    // Predicated region
    $region70: #{scbm_forward.1} parent=1 // pred_check
      _
    $region71: #{scbm_forward.1} parent=1 // pred_check_branch
      %1288 = sbr.rel (0) target = $region73
    $region72: #{scbm_forward.1} parent=1 // pred_region
      _
    $region73: #{scbm_forward.1} parent=1 // pred_fallthru
      _
    // Predicated region
    $region74: #{scbm_forward.1} parent=1 // pred_check
      _
    $region75: #{scbm_forward.1} parent=1 // pred_check_branch
      %1290 = sbr.rel (0) target = $region77
    $region76: #{scbm_forward.1} parent=1 // pred_region
      %s1292 = ssub.s32 128, 128
      %1293 = vsyncadd [#allocation5], %s1292
      %s1295 = sshll.u32 [#allocation4], 4
      %s1296 = int_to_ptr.vmem [resolvable:$true] %s1295
      %1298 = dma.vmem_to_hbm [thread:$0]  %s1296, 128, %s18, [#allocation5]
    $region77: #{scbm_forward.1} parent=1 // pred_fallthru
      _
    // Predicated region
    $region78: #{scbm_forward.1} parent=1 // pred_check
      _
    $region79: #{scbm_forward.1} parent=1 // pred_check_branch
      %1300 = sbr.rel (0) target = $region81
    $region80: #{scbm_forward.1} parent=1 // pred_region
      %1301 = dma.done [#allocation3], 512
    $region81: #{scbm_forward.1} parent=1 // pred_fallthru
      _
    // Predicated region
    $region82: #{scbm_forward.1} parent=1 // pred_check
      _
    $region83: #{scbm_forward.1} parent=1 // pred_check_branch
      %1303 = sbr.rel (0) target = $region85
    $region84: #{scbm_forward.1} parent=1 // pred_region
      _
    $region85: #{scbm_forward.1} parent=1 // pred_fallthru
      _
    // Predicated region
    $region86: #{scbm_forward.1} parent=1 // pred_check
      _
    $region87: #{scbm_forward.1} parent=1 // pred_check_branch
      %1305 = sbr.rel (0) target = $region89
    $region88: #{scbm_forward.1} parent=1 // pred_region
      %1306 = dma.done [#allocation5], 128
    $region89: #{scbm_forward.1} parent=1 // pred_fallthru
      _
    %1307 = vsyncpa [#allocation3], 1
    %1308 = vsyncpa [#allocation5], 1

</llo_original>
